<compile_context>
chip_gen: v7x
topology: tpu7x:2x2x1
jax: 0.10.0
libtpu: 0.0.40
codegen_flags: <defaults>
</compile_context>

<pallas_src>
import math
import functools

import jax
import jax.numpy as jnp
from jax.experimental import pallas as pl
from jax.experimental.pallas import tpu as pltpu


def _cross_attn_kernel(x_ref, y_ref,
                       wq_ref, bq_ref, wk_ref, bk_ref,
                       wv_ref, bv_ref, wo_ref, bo_ref,
                       o_ref,
                       q_scr, m_scr, l_scr, acc_scr,
                       *, n_heads, scale, compute_dtype):
    """Grid = (batch, q_block, kv_block); kv_block is the innermost (reduction) axis.

    x_ref: (1, TQ, E), y_ref: (1, TK, Dc)
    wq_ref/wk_ref/wv_ref: (H, in_dim, d_head)   head-major projection weights
    bq_ref/bk_ref/bv_ref: (H, 1, d_head)
    wo_ref: (H, d_head, E), bo_ref: (1, E)
    Scratch (persist across kv blocks): q (H,TQ,dh), running max/sum (H,TQ,1),
    output accumulator (H,TQ,dh).
    """
    ki = pl.program_id(2)
    cdt = compute_dtype
    H = n_heads

    @pl.when(ki == 0)
    def _init():
        x = x_ref[0].astype(cdt)                                  # (TQ, E)
        xb = jnp.broadcast_to(x, (H,) + x.shape)                  # (H, TQ, E)
        q = jnp.einsum('hqe,hed->hqd', xb, wq_ref[...].astype(cdt),
                       preferred_element_type=jnp.float32)
        q_scr[...] = (q + bq_ref[...]) * scale                    # pre-scaled Q
        m_scr[...] = jnp.full(m_scr.shape, -jnp.inf, jnp.float32)
        l_scr[...] = jnp.zeros(l_scr.shape, jnp.float32)
        acc_scr[...] = jnp.zeros(acc_scr.shape, jnp.float32)

    # Project this KV block for all heads at once (batched matmul, no transposes).
    y = y_ref[0].astype(cdt)                                      # (TK, Dc)
    yb = jnp.broadcast_to(y, (H,) + y.shape)                      # (H, TK, Dc)
    k = jnp.einsum('hke,hed->hkd', yb, wk_ref[...].astype(cdt),
                   preferred_element_type=jnp.float32) + bk_ref[...]   # (H, TK, dh)
    v = jnp.einsum('hke,hed->hkd', yb, wv_ref[...].astype(cdt),
                   preferred_element_type=jnp.float32) + bv_ref[...]   # (H, TK, dh)

    # Scores: contract the head dim of both operands (no explicit K^T).
    s = jnp.einsum('hqd,hkd->hqk', q_scr[...].astype(cdt), k.astype(cdt),
                   preferred_element_type=jnp.float32)            # (H, TQ, TK)

    # Online softmax accumulation.
    m_prev = m_scr[...]
    m_new = jnp.maximum(m_prev, s.max(axis=-1, keepdims=True))    # (H, TQ, 1)
    alpha = jnp.exp(m_prev - m_new)
    p = jnp.exp(s - m_new)                                        # (H, TQ, TK)
    l_scr[...] = alpha * l_scr[...] + p.sum(axis=-1, keepdims=True)
    acc_scr[...] = alpha * acc_scr[...] + jnp.einsum(
        'hqk,hkd->hqd', p.astype(cdt), v.astype(cdt),
        preferred_element_type=jnp.float32)
    m_scr[...] = m_new

    @pl.when(ki == pl.num_programs(2) - 1)
    def _finalize():
        # Normalize the small (H, TQ, dh) accumulator; reciprocal on the EUP.
        inv_l = pl.reciprocal(l_scr[...], approx=True)            # (H, TQ, 1)
        attn = (acc_scr[...] * inv_l).astype(cdt)                 # (H, TQ, dh)
        # Head-concat + output projection fused: per-head matmul then sum over h.
        per_head = jnp.einsum('hqd,hde->hqe', attn, wo_ref[...].astype(cdt),
                              preferred_element_type=jnp.float32)  # (H, TQ, E)
        out = jnp.sum(per_head, axis=0) + bo_ref[...]              # (TQ, E)
        o_ref[0] = out.astype(o_ref.dtype)


def _pick_tile(n, candidates):
    for c in candidates:
        if n % c == 0:
            return c
    return n


def flash_cross_attention(x, y, params, n_heads, compute_dtype=jnp.float32):
    """x: (B, Sq, E) f32, y: (B, Skv, Dc) f32. Returns (B, Sq, E) f32.

    compute_dtype=jnp.bfloat16 enables the bf16-operand / f32-accumulate MXU
    fast path for v6e/v7x; the default keeps f32 operands.
    """
    B, Sq, E = x.shape
    _, Skv, Dc = y.shape
    assert E % n_heads == 0
    d_head = E // n_heads

    # Query / KV block sizes: multiples of 8 that divide the sequence lengths.
    tq = _pick_tile(Sq, (128, 64, 32, 16, 8))
    tk = _pick_tile(Skv, (512, 256, 128, 64, 32, 16, 8))
    n_q_blocks = Sq // tq
    n_kv_blocks = Skv // tk

    # Fold the head split into the weights (done once, outside the kernel).
    wq = params["wq"].reshape(E, n_heads, d_head).transpose(1, 0, 2)   # (H, E, dh)
    wk = params["wk"].reshape(Dc, n_heads, d_head).transpose(1, 0, 2)  # (H, Dc, dh)
    wv = params["wv"].reshape(Dc, n_heads, d_head).transpose(1, 0, 2)  # (H, Dc, dh)
    wo = params["wo"].reshape(n_heads, d_head, E)                      # (H, dh, E)
    bq = params["bq"].reshape(n_heads, 1, d_head)                      # (H, 1, dh)
    bk = params["bk"].reshape(n_heads, 1, d_head)
    bv = params["bv"].reshape(n_heads, 1, d_head)
    bo = params["bo"]                                                  # (1, E)

    kernel = functools.partial(
        _cross_attn_kernel,
        n_heads=n_heads,
        scale=1.0 / math.sqrt(d_head),
        compute_dtype=compute_dtype)

    def full_spec(arr):
        nd = arr.ndim
        return pl.BlockSpec(arr.shape, lambda b, qi, ki, _n=nd: (0,) * _n)

    # TODO(synk): for production shapes, pad E/Dc to multiples of 128 (lane-dense
    # stores) and single-buffer the grid-invariant weights to tighten the v7x
    # VMEM budget further.
    return pl.pallas_call(
        kernel,
        out_shape=jax.ShapeDtypeStruct((B, Sq, E), x.dtype),
        grid_spec=pltpu.PrefetchScalarGridSpec(
            num_scalar_prefetch=0,
            grid=(B, n_q_blocks, n_kv_blocks),
            in_specs=[
                pl.BlockSpec((1, tq, E), lambda b, qi, ki: (b, qi, 0)),   # x
                pl.BlockSpec((1, tk, Dc), lambda b, qi, ki: (b, ki, 0)),  # y (streamed)
                full_spec(wq), full_spec(bq),
                full_spec(wk), full_spec(bk),
                full_spec(wv), full_spec(bv),
                full_spec(wo), full_spec(bo),
            ],
            out_specs=pl.BlockSpec((1, tq, E), lambda b, qi, ki: (b, qi, 0)),
            scratch_shapes=[
                pltpu.VMEM((n_heads, tq, d_head), jnp.float32),  # pre-scaled Q
                pltpu.VMEM((n_heads, tq, 1), jnp.float32),       # running max
                pltpu.VMEM((n_heads, tq, 1), jnp.float32),       # running sum
                pltpu.VMEM((n_heads, tq, d_head), jnp.float32),  # output accumulator
            ],
        ),
        compiler_params=pltpu.CompilerParams(
            dimension_semantics=("parallel", "parallel", "arbitrary"),
            vmem_limit_bytes=64 * 1024 * 1024),
    )(x, y, wq, bq, wk, bk, wv, bv, wo, bo)


def reference(x, y, params, n_heads):
    """Pure-JAX reference matching the PyTorch forward exactly."""
    B, Sq, E = x.shape
    d_head = E // n_heads
    q = x @ params["wq"] + params["bq"]
    k = y @ params["wk"] + params["bk"]
    v = y @ params["wv"] + params["bv"]
    qh = q.reshape(B, Sq, n_heads, d_head).transpose(0, 2, 1, 3)
    kh = k.reshape(B, -1, n_heads, d_head).transpose(0, 2, 1, 3)
    vh = v.reshape(B, -1, n_heads, d_head).transpose(0, 2, 1, 3)
    s = jnp.einsum("bhqd,bhkd->bhqk", qh, kh) / math.sqrt(d_head)
    p = jax.nn.softmax(s, axis=-1)
    o = jnp.einsum("bhqk,bhkd->bhqd", p, vh)
    o = o.transpose(0, 2, 1, 3).reshape(B, Sq, E)
    return o @ params["wo"] + params["bo"]


def init_params(key, d_embeddings, d_cross):
    """Deterministic init mimicking nn.Linear (uniform +/- 1/sqrt(fan_in)).
    Weights stored pre-transposed as (in, out); biases as (1, out)."""
    ks = jax.random.split(key, 8)

    def lin(kw, kb, d_in, d_out):
        bound = 1.0 / math.sqrt(d_in)
        w = jax.random.uniform(kw, (d_in, d_out), jnp.float32, -bound, bound)
        b = jax.random.uniform(kb, (1, d_out), jnp.float32, -bound, bound)
        return w, b

    wq, bq = lin(ks[0], ks[1], d_embeddings, d_embeddings)
    wk, bk = lin(ks[2], ks[3], d_cross, d_embeddings)
    wv, bv = lin(ks[4], ks[5], d_cross, d_embeddings)
    wo, bo = lin(ks[6], ks[7], d_embeddings, d_embeddings)
    return dict(wq=wq, bq=bq, wk=wk, bk=bk, wv=wv, bv=bv, wo=wo, bo=bo)


if __name__ == "__main__":
    # Small shapes consistent with the module's forward (batch, seq, features).
    B, Sq, Skv = 2, 8, 8
    n_heads, d_embeddings, d_cross = 4, 32, 16

    key = jax.random.PRNGKey(0)
    kx, ky, kp = jax.random.split(key, 3)
    x = jax.random.normal(kx, (B, Sq, d_embeddings), jnp.float32)
    y = jax.random.normal(ky, (B, Skv, d_cross), jnp.float32)
    params = init_params(kp, d_embeddings, d_cross)

    out = flash_cross_attention(x, y, params, n_heads)
    out = jax.block_until_ready(out)

    ref = reference(x, y, params, n_heads)
    assert out.shape == (B, Sq, d_embeddings)
    # Tolerance allows for the EUP approximate reciprocal + online softmax.
    assert jnp.allclose(out, ref, rtol=2e-3, atol=2e-3), "mismatch vs reference"

    print("KERNEL_OK")
</pallas_src>

<mosaic_0001>
module attributes {stable_mosaic.version = 11 : i64} {
  func.func @_cross_attn_kernel(%arg0: i32, %arg1: i32, %arg2: i32, %arg3: memref<1x8x32xf32, #tpu.memory_space<vmem>>, %arg4: memref<1x8x16xf32, #tpu.memory_space<vmem>>, %arg5: memref<4x32x8xf32, #tpu.memory_space<vmem>>, %arg6: memref<4x1x8xf32, #tpu.memory_space<vmem>>, %arg7: memref<4x16x8xf32, #tpu.memory_space<vmem>>, %arg8: memref<4x1x8xf32, #tpu.memory_space<vmem>>, %arg9: memref<4x16x8xf32, #tpu.memory_space<vmem>>, %arg10: memref<4x1x8xf32, #tpu.memory_space<vmem>>, %arg11: memref<4x8x32xf32, #tpu.memory_space<vmem>>, %arg12: memref<1x32xf32, #tpu.memory_space<vmem>>, %arg13: memref<1x8x32xf32, #tpu.memory_space<vmem>>, %arg14: memref<4x8x8xf32, #tpu.memory_space<vmem>>, %arg15: memref<4x8x1xf32, #tpu.memory_space<vmem>>, %arg16: memref<4x8x1xf32, #tpu.memory_space<vmem>>, %arg17: memref<4x8x8xf32, #tpu.memory_space<vmem>>) attributes {dimension_semantics = [#tpu.dimension_semantics<parallel>, #tpu.dimension_semantics<parallel>, #tpu.dimension_semantics<arbitrary>], iteration_bounds = array<i64: 2, 1, 1>, scalar_prefetch = 0 : i64, scratch_operands = 4 : i64, tpu.core_type = #tpu.core_type<tc>, window_params = [{transform_indices = @transform_0, window_bounds = array<i64: 1, 8, 32>}, {transform_indices = @transform_1, window_bounds = array<i64: 1, 8, 16>}, {pipeline_mode = #tpu.pipeline_mode<synchronous>, transform_indices = @transform_2, window_bounds = array<i64: 4, 32, 8>}, {pipeline_mode = #tpu.pipeline_mode<synchronous>, transform_indices = @transform_3, window_bounds = array<i64: 4, 1, 8>}, {pipeline_mode = #tpu.pipeline_mode<synchronous>, transform_indices = @transform_4, window_bounds = array<i64: 4, 16, 8>}, {pipeline_mode = #tpu.pipeline_mode<synchronous>, transform_indices = @transform_5, window_bounds = array<i64: 4, 1, 8>}, {pipeline_mode = #tpu.pipeline_mode<synchronous>, transform_indices = @transform_6, window_bounds = array<i64: 4, 16, 8>}, {pipeline_mode = #tpu.pipeline_mode<synchronous>, transform_indices = @transform_7, window_bounds = array<i64: 4, 1, 8>}, {pipeline_mode = #tpu.pipeline_mode<synchronous>, transform_indices = @transform_8, window_bounds = array<i64: 4, 8, 32>}, {pipeline_mode = #tpu.pipeline_mode<synchronous>, transform_indices = @transform_9, window_bounds = array<i64: 1, 32>}, {transform_indices = @transform_10, window_bounds = array<i64: 1, 8, 32>}]} {
    %c0_i32 = arith.constant 0 : i32
    %0 = arith.cmpi eq, %arg2, %c0_i32 : i32
    %1 = arith.extui %0 : i1 to i32
    %c0_i32_0 = arith.constant 0 : i32
    %2 = arith.cmpi ne, %1, %c0_i32_0 : i32
    scf.if %2 {
      %c0_43 = arith.constant 0 : index
      %c0_44 = arith.constant 0 : index
      %c0_45 = arith.constant 0 : index
      %44 = vector.load %arg3[%c0_43, %c0_44, %c0_45] : memref<1x8x32xf32, #tpu.memory_space<vmem>>, vector<1x8x32xf32>
      %45 = vector.shape_cast %44 : vector<1x8x32xf32> to vector<8x32xf32>
      %46 = vector.shape_cast %45 : vector<8x32xf32> to vector<1x8x32xf32>
      %47 = vector.broadcast %46 : vector<1x8x32xf32> to vector<4x8x32xf32>
      %c0_46 = arith.constant 0 : index
      %c0_47 = arith.constant 0 : index
      %c0_48 = arith.constant 0 : index
      %48 = vector.load %arg5[%c0_46, %c0_47, %c0_48] : memref<4x32x8xf32, #tpu.memory_space<vmem>>, vector<4x32x8xf32>
      "tpu.trace_start"() <{level = 10 : i32, message = "hqe,hed->hqd"}> : () -> ()
      %cst_49 = arith.constant dense<0.000000e+00> : vector<4x8x8xf32>
      %49 = tpu.matmul %47, %48, %cst_49 {dimension_numbers = #tpu.dot_dimension_numbers<[2], [1], [1], [2], [0, 0, 0, 1, 1, 2], [0], [0]>} : vector<4x8x32xf32>, vector<4x32x8xf32>, vector<4x8x8xf32> -> vector<4x8x8xf32>
      "tpu.trace_stop"() : () -> ()
      %c0_50 = arith.constant 0 : index
      %c0_51 = arith.constant 0 : index
      %c0_52 = arith.constant 0 : index
      %50 = vector.load %arg6[%c0_50, %c0_51, %c0_52] : memref<4x1x8xf32, #tpu.memory_space<vmem>>, vector<4x1x8xf32>
      %51 = vector.broadcast %50 : vector<4x1x8xf32> to vector<4x8x8xf32>
      %52 = arith.addf %49, %51 : vector<4x8x8xf32>
      %cst_53 = arith.constant 0.353553385 : f32
      %53 = vector.broadcast %cst_53 : f32 to vector<4x8x8xf32>
      %54 = arith.mulf %52, %53 : vector<4x8x8xf32>
      %c0_54 = arith.constant 0 : index
      %c0_55 = arith.constant 0 : index
      %c0_56 = arith.constant 0 : index
      %55 = vector.load %arg14[%c0_54, %c0_55, %c0_56] : memref<4x8x8xf32, #tpu.memory_space<vmem>>, vector<4x8x8xf32>
      tpu.vector_store %arg14[%c0_54, %c0_55, %c0_56], %54 {strides = array<i32>} : memref<4x8x8xf32, #tpu.memory_space<vmem>>, vector<4x8x8xf32>,
      %cst_57 = arith.constant 0xFF800000 : f32
      %56 = vector.broadcast %cst_57 : f32 to vector<4x8x1xf32>
      %c0_58 = arith.constant 0 : index
      %c0_59 = arith.constant 0 : index
      %c0_60 = arith.constant 0 : index
      %57 = vector.load %arg15[%c0_58, %c0_59, %c0_60] : memref<4x8x1xf32, #tpu.memory_space<vmem>>, vector<4x8x1xf32>
      tpu.vector_store %arg15[%c0_58, %c0_59, %c0_60], %56 {strides = array<i32>} : memref<4x8x1xf32, #tpu.memory_space<vmem>>, vector<4x8x1xf32>,
      %cst_61 = arith.constant 0.000000e+00 : f32
      %58 = vector.broadcast %cst_61 : f32 to vector<4x8x1xf32>
      %c0_62 = arith.constant 0 : index
      %c0_63 = arith.constant 0 : index
      %c0_64 = arith.constant 0 : index
      %59 = vector.load %arg16[%c0_62, %c0_63, %c0_64] : memref<4x8x1xf32, #tpu.memory_space<vmem>>, vector<4x8x1xf32>
      tpu.vector_store %arg16[%c0_62, %c0_63, %c0_64], %58 {strides = array<i32>} : memref<4x8x1xf32, #tpu.memory_space<vmem>>, vector<4x8x1xf32>,
      %cst_65 = arith.constant 0.000000e+00 : f32
      %60 = vector.broadcast %cst_65 : f32 to vector<4x8x8xf32>
      %c0_66 = arith.constant 0 : index
      %c0_67 = arith.constant 0 : index
      %c0_68 = arith.constant 0 : index
      %61 = vector.load %arg17[%c0_66, %c0_67, %c0_68] : memref<4x8x8xf32, #tpu.memory_space<vmem>>, vector<4x8x8xf32>
      tpu.vector_store %arg17[%c0_66, %c0_67, %c0_68], %60 {strides = array<i32>} : memref<4x8x8xf32, #tpu.memory_space<vmem>>, vector<4x8x8xf32>,
    } else {
    }
    %c0 = arith.constant 0 : index
    %c0_1 = arith.constant 0 : index
    %c0_2 = arith.constant 0 : index
    %3 = vector.load %arg4[%c0, %c0_1, %c0_2] : memref<1x8x16xf32, #tpu.memory_space<vmem>>, vector<1x8x16xf32>
    %4 = vector.shape_cast %3 : vector<1x8x16xf32> to vector<8x16xf32>
    %5 = vector.shape_cast %4 : vector<8x16xf32> to vector<1x8x16xf32>
    %6 = vector.broadcast %5 : vector<1x8x16xf32> to vector<4x8x16xf32>
    %c0_3 = arith.constant 0 : index
    %c0_4 = arith.constant 0 : index
    %c0_5 = arith.constant 0 : index
    %7 = vector.load %arg7[%c0_3, %c0_4, %c0_5] : memref<4x16x8xf32, #tpu.memory_space<vmem>>, vector<4x16x8xf32>
    "tpu.trace_start"() <{level = 10 : i32, message = "hke,hed->hkd"}> : () -> ()
    %cst = arith.constant dense<0.000000e+00> : vector<4x8x8xf32>
    %8 = tpu.matmul %6, %7, %cst {dimension_numbers = #tpu.dot_dimension_numbers<[2], [1], [1], [2], [0, 0, 0, 1, 1, 2], [0], [0]>} : vector<4x8x16xf32>, vector<4x16x8xf32>, vector<4x8x8xf32> -> vector<4x8x8xf32>
    "tpu.trace_stop"() : () -> ()
    %c0_6 = arith.constant 0 : index
    %c0_7 = arith.constant 0 : index
    %c0_8 = arith.constant 0 : index
    %9 = vector.load %arg8[%c0_6, %c0_7, %c0_8] : memref<4x1x8xf32, #tpu.memory_space<vmem>>, vector<4x1x8xf32>
    %10 = vector.broadcast %9 : vector<4x1x8xf32> to vector<4x8x8xf32>
    %11 = arith.addf %8, %10 : vector<4x8x8xf32>
    %c0_9 = arith.constant 0 : index
    %c0_10 = arith.constant 0 : index
    %c0_11 = arith.constant 0 : index
    %12 = vector.load %arg9[%c0_9, %c0_10, %c0_11] : memref<4x16x8xf32, #tpu.memory_space<vmem>>, vector<4x16x8xf32>
    "tpu.trace_start"() <{level = 10 : i32, message = "hke,hed->hkd"}> : () -> ()
    %cst_12 = arith.constant dense<0.000000e+00> : vector<4x8x8xf32>
    %13 = tpu.matmul %6, %12, %cst_12 {dimension_numbers = #tpu.dot_dimension_numbers<[2], [1], [1], [2], [0, 0, 0, 1, 1, 2], [0], [0]>} : vector<4x8x16xf32>, vector<4x16x8xf32>, vector<4x8x8xf32> -> vector<4x8x8xf32>
    "tpu.trace_stop"() : () -> ()
    %c0_13 = arith.constant 0 : index
    %c0_14 = arith.constant 0 : index
    %c0_15 = arith.constant 0 : index
    %14 = vector.load %arg10[%c0_13, %c0_14, %c0_15] : memref<4x1x8xf32, #tpu.memory_space<vmem>>, vector<4x1x8xf32>
    %15 = vector.broadcast %14 : vector<4x1x8xf32> to vector<4x8x8xf32>
    %16 = arith.addf %13, %15 : vector<4x8x8xf32>
    %c0_16 = arith.constant 0 : index
    %c0_17 = arith.constant 0 : index
    %c0_18 = arith.constant 0 : index
    %17 = vector.load %arg14[%c0_16, %c0_17, %c0_18] : memref<4x8x8xf32, #tpu.memory_space<vmem>>, vector<4x8x8xf32>
    "tpu.trace_start"() <{level = 10 : i32, message = "hqd,hkd->hqk"}> : () -> ()
    %cst_19 = arith.constant dense<0.000000e+00> : vector<4x8x8xf32>
    %18 = tpu.matmul %17, %11, %cst_19 {dimension_numbers = #tpu.dot_dimension_numbers<[2], [2], [1], [1], [0, 0, 0, 1, 1, 1], [0], [0]>} : vector<4x8x8xf32>, vector<4x8x8xf32>, vector<4x8x8xf32> -> vector<4x8x8xf32>
    "tpu.trace_stop"() : () -> ()
    %c0_20 = arith.constant 0 : index
    %c0_21 = arith.constant 0 : index
    %c0_22 = arith.constant 0 : index
    %19 = vector.load %arg15[%c0_20, %c0_21, %c0_22] : memref<4x8x1xf32, #tpu.memory_space<vmem>>, vector<4x8x1xf32>
    %cst_23 = arith.constant dense<0xFF800000> : vector<4x8xf32>
    %20 = vector.multi_reduction <maximumf>, %18, %cst_23 [2] : vector<4x8x8xf32> to vector<4x8xf32>
    %21 = vector.shape_cast %20 : vector<4x8xf32> to vector<4x8x1xf32>
    %22 = arith.maximumf %19, %21 : vector<4x8x1xf32>
    %23 = arith.subf %19, %22 : vector<4x8x1xf32>
    %24 = math.exp %23 : vector<4x8x1xf32>
    %25 = vector.broadcast %22 : vector<4x8x1xf32> to vector<4x8x8xf32>
    %26 = arith.subf %18, %25 : vector<4x8x8xf32>
    %27 = math.exp %26 : vector<4x8x8xf32>
    %c0_24 = arith.constant 0 : index
    %c0_25 = arith.constant 0 : index
    %c0_26 = arith.constant 0 : index
    %28 = vector.load %arg16[%c0_24, %c0_25, %c0_26] : memref<4x8x1xf32, #tpu.memory_space<vmem>>, vector<4x8x1xf32>
    %29 = arith.mulf %24, %28 : vector<4x8x1xf32>
    %cst_27 = arith.constant dense<0.000000e+00> : vector<4x8xf32>
    %30 = vector.multi_reduction <add>, %27, %cst_27 [2] : vector<4x8x8xf32> to vector<4x8xf32>
    %31 = vector.shape_cast %30 : vector<4x8xf32> to vector<4x8x1xf32>
    %32 = arith.addf %29, %31 : vector<4x8x1xf32>
    %c0_28 = arith.constant 0 : index
    %c0_29 = arith.constant 0 : index
    %c0_30 = arith.constant 0 : index
    %33 = vector.load %arg16[%c0_28, %c0_29, %c0_30] : memref<4x8x1xf32, #tpu.memory_space<vmem>>, vector<4x8x1xf32>
    tpu.vector_store %arg16[%c0_28, %c0_29, %c0_30], %32 {strides = array<i32>} : memref<4x8x1xf32, #tpu.memory_space<vmem>>, vector<4x8x1xf32>,
    %c0_31 = arith.constant 0 : index
    %c0_32 = arith.constant 0 : index
    %c0_33 = arith.constant 0 : index
    %34 = vector.load %arg17[%c0_31, %c0_32, %c0_33] : memref<4x8x8xf32, #tpu.memory_space<vmem>>, vector<4x8x8xf32>
    %35 = vector.broadcast %24 : vector<4x8x1xf32> to vector<4x8x8xf32>
    %36 = arith.mulf %35, %34 : vector<4x8x8xf32>
    "tpu.trace_start"() <{level = 10 : i32, message = "hqk,hkd->hqd"}> : () -> ()
    %cst_34 = arith.constant dense<0.000000e+00> : vector<4x8x8xf32>
    %37 = tpu.matmul %27, %16, %cst_34 {dimension_numbers = #tpu.dot_dimension_numbers<[2], [1], [1], [2], [0, 0, 0, 1, 1, 2], [0], [0]>} : vector<4x8x8xf32>, vector<4x8x8xf32>, vector<4x8x8xf32> -> vector<4x8x8xf32>
    "tpu.trace_stop"() : () -> ()
    %38 = arith.addf %36, %37 : vector<4x8x8xf32>
    %c0_35 = arith.constant 0 : index
    %c0_36 = arith.constant 0 : index
    %c0_37 = arith.constant 0 : index
    %39 = vector.load %arg17[%c0_35, %c0_36, %c0_37] : memref<4x8x8xf32, #tpu.memory_space<vmem>>, vector<4x8x8xf32>
    tpu.vector_store %arg17[%c0_35, %c0_36, %c0_37], %38 {strides = array<i32>} : memref<4x8x8xf32, #tpu.memory_space<vmem>>, vector<4x8x8xf32>,
    %c0_38 = arith.constant 0 : index
    %c0_39 = arith.constant 0 : index
    %c0_40 = arith.constant 0 : index
    %40 = vector.load %arg15[%c0_38, %c0_39, %c0_40] : memref<4x8x1xf32, #tpu.memory_space<vmem>>, vector<4x8x1xf32>
    tpu.vector_store %arg15[%c0_38, %c0_39, %c0_40], %22 {strides = array<i32>} : memref<4x8x1xf32, #tpu.memory_space<vmem>>, vector<4x8x1xf32>,
    %c0_i32_41 = arith.constant 0 : i32
    %41 = arith.cmpi eq, %arg2, %c0_i32_41 : i32
    %42 = arith.extui %41 : i1 to i32
    %c0_i32_42 = arith.constant 0 : i32
    %43 = arith.cmpi ne, %42, %c0_i32_42 : i32
    scf.if %43 {
      %c0_43 = arith.constant 0 : index
      %c0_44 = arith.constant 0 : index
      %c0_45 = arith.constant 0 : index
      %44 = vector.load %arg16[%c0_43, %c0_44, %c0_45] : memref<4x8x1xf32, #tpu.memory_space<vmem>>, vector<4x8x1xf32>
      %45 = tpu.reciprocal %44 {approx = true} : vector<4x8x1xf32> -> vector<4x8x1xf32>
      %c0_46 = arith.constant 0 : index
      %c0_47 = arith.constant 0 : index
      %c0_48 = arith.constant 0 : index
      %46 = vector.load %arg17[%c0_46, %c0_47, %c0_48] : memref<4x8x8xf32, #tpu.memory_space<vmem>>, vector<4x8x8xf32>
      %47 = vector.broadcast %45 : vector<4x8x1xf32> to vector<4x8x8xf32>
      %48 = arith.mulf %46, %47 : vector<4x8x8xf32>
      %c0_49 = arith.constant 0 : index
      %c0_50 = arith.constant 0 : index
      %c0_51 = arith.constant 0 : index
      %49 = vector.load %arg11[%c0_49, %c0_50, %c0_51] : memref<4x8x32xf32, #tpu.memory_space<vmem>>, vector<4x8x32xf32>
      "tpu.trace_start"() <{level = 10 : i32, message = "hqd,hde->hqe"}> : () -> ()
      %cst_52 = arith.constant dense<0.000000e+00> : vector<4x8x32xf32>
      %50 = tpu.matmul %48, %49, %cst_52 {dimension_numbers = #tpu.dot_dimension_numbers<[2], [1], [1], [2], [0, 0, 0, 1, 1, 2], [0], [0]>} : vector<4x8x8xf32>, vector<4x8x32xf32>, vector<4x8x32xf32> -> vector<4x8x32xf32>
      "tpu.trace_stop"() : () -> ()
      %cst_53 = arith.constant dense<0.000000e+00> : vector<8x32xf32>
      %51 = vector.multi_reduction <add>, %50, %cst_53 [0] : vector<4x8x32xf32> to vector<8x32xf32>
      %c0_54 = arith.constant 0 : index
      %c0_55 = arith.constant 0 : index
      %52 = vector.load %arg12[%c0_54, %c0_55] : memref<1x32xf32, #tpu.memory_space<vmem>>, vector<1x32xf32>
      %53 = vector.broadcast %52 : vector<1x32xf32> to vector<8x32xf32>
      %54 = arith.addf %51, %53 : vector<8x32xf32>
      %c0_56 = arith.constant 0 : index
      %c0_57 = arith.constant 0 : index
      %c0_58 = arith.constant 0 : index
      %55 = vector.load %arg13[%c0_56, %c0_57, %c0_58] : memref<1x8x32xf32, #tpu.memory_space<vmem>>, vector<1x8x32xf32>
      %56 = vector.shape_cast %55 : vector<1x8x32xf32> to vector<8x32xf32>
      %57 = vector.shape_cast %54 : vector<8x32xf32> to vector<1x8x32xf32>
      tpu.vector_store %arg13[%c0_56, %c0_57, %c0_58], %57 {strides = array<i32>} : memref<1x8x32xf32, #tpu.memory_space<vmem>>, vector<1x8x32xf32>,
    } else {
    }
    return
  }
  func.func @transform_0(%arg0: i32, %arg1: i32, %arg2: i32) -> (i32, i32, i32) {
    %c0_i32 = arith.constant 0 : i32
    %c0_i32_0 = arith.constant 0 : i32
    return %arg0, %arg1, %c0_i32 : i32, i32, i32
  }
  func.func @transform_1(%arg0: i32, %arg1: i32, %arg2: i32) -> (i32, i32, i32) {
    %c0_i32 = arith.constant 0 : i32
    %c0_i32_0 = arith.constant 0 : i32
    return %arg0, %arg2, %c0_i32 : i32, i32, i32
  }
  func.func @transform_2(%arg0: i32, %arg1: i32, %arg2: i32) -> (i32, i32, i32) {
    %c0_i32 = arith.constant 0 : i32
    %c0_i32_0 = arith.constant 0 : i32
    %c0_i32_1 = arith.constant 0 : i32
    %c0_i32_2 = arith.constant 0 : i32
    return %c0_i32, %c0_i32_0, %c0_i32_1 : i32, i32, i32
  }
  func.func @transform_3(%arg0: i32, %arg1: i32, %arg2: i32) -> (i32, i32, i32) {
    %c0_i32 = arith.constant 0 : i32
    %c0_i32_0 = arith.constant 0 : i32
    %c0_i32_1 = arith.constant 0 : i32
    %c0_i32_2 = arith.constant 0 : i32
    return %c0_i32, %c0_i32_0, %c0_i32_1 : i32, i32, i32
  }
  func.func @transform_4(%arg0: i32, %arg1: i32, %arg2: i32) -> (i32, i32, i32) {
    %c0_i32 = arith.constant 0 : i32
    %c0_i32_0 = arith.constant 0 : i32
    %c0_i32_1 = arith.constant 0 : i32
    %c0_i32_2 = arith.constant 0 : i32
    return %c0_i32, %c0_i32_0, %c0_i32_1 : i32, i32, i32
  }
  func.func @transform_5(%arg0: i32, %arg1: i32, %arg2: i32) -> (i32, i32, i32) {
    %c0_i32 = arith.constant 0 : i32
    %c0_i32_0 = arith.constant 0 : i32
    %c0_i32_1 = arith.constant 0 : i32
    %c0_i32_2 = arith.constant 0 : i32
    return %c0_i32, %c0_i32_0, %c0_i32_1 : i32, i32, i32
  }
  func.func @transform_6(%arg0: i32, %arg1: i32, %arg2: i32) -> (i32, i32, i32) {
    %c0_i32 = arith.constant 0 : i32
    %c0_i32_0 = arith.constant 0 : i32
    %c0_i32_1 = arith.constant 0 : i32
    %c0_i32_2 = arith.constant 0 : i32
    return %c0_i32, %c0_i32_0, %c0_i32_1 : i32, i32, i32
  }
  func.func @transform_7(%arg0: i32, %arg1: i32, %arg2: i32) -> (i32, i32, i32) {
    %c0_i32 = arith.constant 0 : i32
    %c0_i32_0 = arith.constant 0 : i32
    %c0_i32_1 = arith.constant 0 : i32
    %c0_i32_2 = arith.constant 0 : i32
    return %c0_i32, %c0_i32_0, %c0_i32_1 : i32, i32, i32
  }
  func.func @transform_8(%arg0: i32, %arg1: i32, %arg2: i32) -> (i32, i32, i32) {
    %c0_i32 = arith.constant 0 : i32
    %c0_i32_0 = arith.constant 0 : i32
    %c0_i32_1 = arith.constant 0 : i32
    %c0_i32_2 = arith.constant 0 : i32
    return %c0_i32, %c0_i32_0, %c0_i32_1 : i32, i32, i32
  }
  func.func @transform_9(%arg0: i32, %arg1: i32, %arg2: i32) -> (i32, i32) {
    %c0_i32 = arith.constant 0 : i32
    %c0_i32_0 = arith.constant 0 : i32
    %c0_i32_1 = arith.constant 0 : i32
    return %c0_i32, %c0_i32_0 : i32, i32
  }
  func.func @transform_10(%arg0: i32, %arg1: i32, %arg2: i32) -> (i32, i32, i32) {
    %c0_i32 = arith.constant 0 : i32
    %c0_i32_0 = arith.constant 0 : i32
    return %arg0, %arg1, %c0_i32 : i32, i32, i32
  }
}

</mosaic_0001>

<llo_original>
// kernel: tpu_custom_call.1
$region0: #{tpu_custom_call.1}
  #allocation0 [shape = 'u32[]', space=smem, size = 0x4, offset = 0x4, fixed_abs, tag = 'smem constant byte address 0x4 - core index']
  #allocation1 [shape = 'u32[144,128]{1,0:T(1,128)}', space=vmem, size = 0x12000, scoped, tag = 'internal scratch']
  #allocation2 [shape = 'f32[4,8,8]{2,1,0:T(8,128)}', space=vmem, size = 0x4000, scoped, tag = 'scratch operand']
  #allocation3 [shape = 'f32[4,8,1]{2,1,0:T(8,128)}', space=vmem, size = 0x4000, scoped, tag = 'scratch operand']
  #allocation4 [shape = 'f32[4,8,1]{2,1,0:T(8,128)}', space=vmem, size = 0x4000, scoped, tag = 'scratch operand']
  #allocation5 [shape = 'f32[4,8,8]{2,1,0:T(8,128)}', space=vmem, size = 0x4000, scoped, tag = 'scratch operand']
  %s0 = inlined_call_operand.hbm [shape: f32[2,8,32], index: 0, kind: input, shape index: {}]
  %s1 = inlined_call_operand.hbm [shape: f32[2,8,16], index: 1, kind: input, shape index: {}]
  %s2 = inlined_call_operand.hbm [shape: f32[4,32,8], index: 2, kind: input, shape index: {}]
  %s3 = inlined_call_operand.hbm [shape: f32[4,1,8], index: 3, kind: input, shape index: {}]
  %s4 = inlined_call_operand.hbm [shape: f32[4,16,8], index: 4, kind: input, shape index: {}]
  %s5 = inlined_call_operand.hbm [shape: f32[4,1,8], index: 5, kind: input, shape index: {}]
  %s6 = inlined_call_operand.hbm [shape: f32[4,16,8], index: 6, kind: input, shape index: {}]
  %s7 = inlined_call_operand.hbm [shape: f32[4,1,8], index: 7, kind: input, shape index: {}]
  %s8 = inlined_call_operand.hbm [shape: f32[4,8,32], index: 8, kind: input, shape index: {}]
  %s9 = inlined_call_operand.hbm [shape: f32[1,32], index: 9, kind: input, shape index: {}]
  %s10 = inlined_call_operand.hbm [shape: f32[2,8,32], index: 10, kind: output, shape index: {}]
  %s11 = sld [smem:[#allocation0]]
  $region121: #{tpu_custom_call.1} parent=0
    _
  %s13 = ssub.s32 1, %s11
  %s14 = scalar_select 0, %s13, %s11
  $region1: #{tpu_custom_call.1} parent=0
    #allocation6 [shape = 'u8[8192]{0}', space=vmem, size = 0x2000, scoped, tag = 'input window, operand 0']
    #allocation7 [shape = 's32[2]{0}', space=sflag, size = 0x8, scoped, tag = 'scoped memory for tpu_custom_call.1']
    #allocation8 [shape = 's32[2]{0}', space=sflag, size = 0x8, scoped, tag = 'scoped memory for tpu_custom_call.1']
    #allocation9 [shape = 'u8[8192]{0}', space=vmem, size = 0x2000, scoped, tag = 'input window, operand 1']
    #allocation10 [shape = 's32[2]{0}', space=sflag, size = 0x8, scoped, tag = 'scoped memory for tpu_custom_call.1']
    #allocation11 [shape = 'u8[65536]{0}', space=vmem, size = 0x10000, scoped, tag = 'input window, operand 2, single buffered']
    #allocation12 [shape = 'u8[2048]{0}', space=vmem, size = 0x800, scoped, tag = 'input window, operand 3, single buffered']
    #allocation13 [shape = 's32[1]{0}', space=sflag, size = 0x4, scoped, tag = 'scoped memory for tpu_custom_call.1']
    #allocation14 [shape = 'u8[32768]{0}', space=vmem, size = 0x8000, scoped, tag = 'input window, operand 4, single buffered']
    #allocation15 [shape = 'u8[2048]{0}', space=vmem, size = 0x800, scoped, tag = 'input window, operand 5, single buffered']
    #allocation16 [shape = 's32[1]{0}', space=sflag, size = 0x4, scoped, tag = 'scoped memory for tpu_custom_call.1']
    #allocation17 [shape = 'u8[32768]{0}', space=vmem, size = 0x8000, scoped, tag = 'input window, operand 6, single buffered']
    #allocation18 [shape = 'u8[2048]{0}', space=vmem, size = 0x800, scoped, tag = 'input window, operand 7, single buffered']
    #allocation19 [shape = 's32[1]{0}', space=sflag, size = 0x4, scoped, tag = 'scoped memory for tpu_custom_call.1']
    #allocation20 [shape = 'u8[16384]{0}', space=vmem, size = 0x4000, scoped, tag = 'input window, operand 8, single buffered']
    #allocation21 [shape = 'u8[512]{0}', space=vmem, size = 0x400, scoped, tag = 'input window, operand 9, single buffered']
    #allocation22 [shape = 's32[1]{0}', space=sflag, size = 0x4, scoped, tag = 'scoped memory for tpu_custom_call.1']
    #allocation23 [shape = 'u8[8192]{0}', space=vmem, size = 0x2000, scoped, tag = 'output window, operand 0']
    %15 = vsyncpa [#allocation7], 0
    %s16 = scalar_lea.sflag [#allocation7], 1
    %17 = vsyncpa %s16, 0
    %18 = vsyncpa [#allocation10], 0
    %s19 = scalar_lea.sflag [#allocation10], 1
    %20 = vsyncpa %s19, 0
    %21 = vsyncpa [#allocation13], 0
    %22 = vsyncpa [#allocation16], 0
    %23 = vsyncpa [#allocation19], 0
    %24 = vsyncpa [#allocation22], 0
    %25 = vsyncpa [#allocation8], 0
    %s26 = scalar_lea.sflag [#allocation8], 1
    %27 = vsyncpa %s26, 0
    loop: start=0, step=1, limit=4
    $region2: #{tpu_custom_call.1} parent=1 // loop_pre_header
      _
    $region3: #{tpu_custom_call.1} parent=1 // loop_header
      %s29 = sphi 0, %s33
      %p30 = scmp.ge.s32.totalorder %s29, 4
      %s36 = sphi 0, %s55
      %s37 = sphi 0, %s51
      %s38 = sphi 0, %s47
      %s39 = sphi 0, %s36
      %s40 = sphi 0, %s37
      %s41 = sphi 0, %s38
      %s42 = sphi 0, %s39
      %s43 = sphi 0, %s40
      %s44 = sphi 0, %s41
      %s60 = sphi 0, %s62
      %s63 = sphi 0, %s60
      %s64 = sphi 0, %s63
      %s80 = sphi 0, %s64
      %s88 = sphi 0, %s90
      %s91 = sphi 0, %s88
      %s92 = sphi 0, %s91
      %s108 = sphi 0, %s92
      %s112 = sphi 0, %s112
      %s114 = sphi 0, %s112
      %s115 = sphi 0, %s114
      %s129 = sphi 0, %s115
      %s133 = sphi 0, %s133
      %s135 = sphi 0, %s133
      %s136 = sphi 0, %s135
      %s150 = sphi 0, %s136
      %s154 = sphi 0, %s154
      %s156 = sphi 0, %s154
      %s157 = sphi 0, %s156
      %s171 = sphi 0, %s157
      %s175 = sphi 0, %s175
      %s177 = sphi 0, %s175
      %s178 = sphi 0, %s177
      %s192 = sphi 0, %s178
      %s196 = sphi 0, %s196
      %s198 = sphi 0, %s196
      %s199 = sphi 0, %s198
      %s213 = sphi 0, %s199
      %s217 = sphi 0, %s217
      %s219 = sphi 0, %s217
      %s220 = sphi 0, %s219
      %s234 = sphi 0, %s220
      %s238 = sphi 0, %s238
      %s240 = sphi 0, %s238
      %s241 = sphi 0, %s240
      %s255 = sphi 0, %s241
      %s259 = sphi 0, %s259
      %s261 = sphi 0, %s259
      %s262 = sphi 0, %s261
      %s276 = sphi 0, %s262
      %s284 = sphi 0, %s286
      %s287 = sphi 0, %s284
      %s288 = sphi 0, %s287
      %s304 = sphi 0, %s288
    $region4: #{tpu_custom_call.1} parent=1 // loop_header_branch
      %32 = sbr.rel (%p30) target = $region8
    $region5: #{tpu_custom_call.1} parent=1 // loop_body
      %s34 = ssub.s32 %s29, 1
      %s35 = ssub.s32 %s29, 2
      %s45 = sadd.s32 1, %s38
      %p46 = scmp.ge.s32.totalorder %s45, 1
      %s47 = scalar_select %p46, 0, %s45
      %s48 = sadd.s32 1, %s37
      %s49 = scalar_select %p46, %s48, %s37
      %p50 = scmp.ge.s32.totalorder %s49, 1
      %s51 = scalar_select %p50, 0, %s49
      %s52 = sadd.s32 1, %s36
      %s53 = scalar_select %p50, %s52, %s36
      %p54 = scmp.ge.s32.totalorder %s53, 2
      %s55 = scalar_select %p54, 0, %s53
      %s56 = ssub.s32 %s36, %s55
      %s57 = ssub.s32 %s37, %s51
      %s58 = sor.u32 %s56, %s57
      %p59 = scmp.eq.s32.totalorder %s58, 0
      %s61 = sadd.s32 %s60, 1
      %s62 = scalar_select %p59, %s60, %s61
      %p65 = pneg %p59
      %p66 = scmp.eq.s32.totalorder %s29, 1
      %p67 = por %p65, %p66
      %p68 = scmp.ne.s32.totalorder %s60, %s63
      %p69 = scmp.eq.s32.totalorder %s29, 0
      %p70 = por %p68, %p69
      %p71 = scmp.ne.s32.totalorder %s60, %s63
      %p72 = scmp.eq.s32.totalorder %s34, 1
      %p73 = por %p71, %p72
      %p74 = scmp.ne.s32.totalorder %s63, %s64
      %p75 = scmp.eq.s32.totalorder %s34, 0
      %p76 = por %p74, %p75
      %p77 = scmp.ne.s32.totalorder %s63, %s64
      %p78 = scmp.eq.s32.totalorder %s35, 1
      %p79 = por %p77, %p78
      %p81 = scmp.ne.s32.totalorder %s64, %s80
      %p82 = scmp.eq.s32.totalorder %s35, 0
      %p83 = por %p81, %p82
      %s84 = ssub.s32 %s36, %s55
      %s85 = ssub.s32 %s38, %s47
      %s86 = sor.u32 %s84, %s85
      %p87 = scmp.eq.s32.totalorder %s86, 0
      %s89 = sadd.s32 %s88, 1
      %s90 = scalar_select %p87, %s88, %s89
      %p93 = pneg %p87
      %p94 = scmp.eq.s32.totalorder %s29, 1
      %p95 = por %p93, %p94
      %p96 = scmp.ne.s32.totalorder %s88, %s91
      %p97 = scmp.eq.s32.totalorder %s29, 0
      %p98 = por %p96, %p97
      %p99 = scmp.ne.s32.totalorder %s88, %s91
      %p100 = scmp.eq.s32.totalorder %s34, 1
      %p101 = por %p99, %p100
      %p102 = scmp.ne.s32.totalorder %s91, %s92
      %p103 = scmp.eq.s32.totalorder %s34, 0
      %p104 = por %p102, %p103
      %p105 = scmp.ne.s32.totalorder %s91, %s92
      %p106 = scmp.eq.s32.totalorder %s35, 1
      %p107 = por %p105, %p106
      %p109 = scmp.ne.s32.totalorder %s92, %s108
      %p110 = scmp.eq.s32.totalorder %s35, 0
      %p111 = por %p109, %p110
      %s113 = sadd.s32 %s112, 1
      %p116 = scmp.eq.s32.totalorder %s29, 1
      %p117 = scmp.ne.s32.totalorder %s112, %s114
      %p118 = scmp.eq.s32.totalorder %s29, 0
      %p119 = por %p117, %p118
      %p120 = scmp.ne.s32.totalorder %s112, %s114
      %p121 = scmp.eq.s32.totalorder %s34, 1
      %p122 = por %p120, %p121
      %p123 = scmp.ne.s32.totalorder %s114, %s115
      %p124 = scmp.eq.s32.totalorder %s34, 0
      %p125 = por %p123, %p124
      %p126 = scmp.ne.s32.totalorder %s114, %s115
      %p127 = scmp.eq.s32.totalorder %s35, 1
      %p128 = por %p126, %p127
      %p130 = scmp.ne.s32.totalorder %s115, %s129
      %p131 = scmp.eq.s32.totalorder %s35, 0
      %p132 = por %p130, %p131
      %s134 = sadd.s32 %s133, 1
      %p137 = scmp.eq.s32.totalorder %s29, 1
      %p138 = scmp.ne.s32.totalorder %s133, %s135
      %p139 = scmp.eq.s32.totalorder %s29, 0
      %p140 = por %p138, %p139
      %p141 = scmp.ne.s32.totalorder %s133, %s135
      %p142 = scmp.eq.s32.totalorder %s34, 1
      %p143 = por %p141, %p142
      %p144 = scmp.ne.s32.totalorder %s135, %s136
      %p145 = scmp.eq.s32.totalorder %s34, 0
      %p146 = por %p144, %p145
      %p147 = scmp.ne.s32.totalorder %s135, %s136
      %p148 = scmp.eq.s32.totalorder %s35, 1
      %p149 = por %p147, %p148
      %p151 = scmp.ne.s32.totalorder %s136, %s150
      %p152 = scmp.eq.s32.totalorder %s35, 0
      %p153 = por %p151, %p152
      %s155 = sadd.s32 %s154, 1
      %p158 = scmp.eq.s32.totalorder %s29, 1
      %p159 = scmp.ne.s32.totalorder %s154, %s156
      %p160 = scmp.eq.s32.totalorder %s29, 0
      %p161 = por %p159, %p160
      %p162 = scmp.ne.s32.totalorder %s154, %s156
      %p163 = scmp.eq.s32.totalorder %s34, 1
      %p164 = por %p162, %p163
      %p165 = scmp.ne.s32.totalorder %s156, %s157
      %p166 = scmp.eq.s32.totalorder %s34, 0
      %p167 = por %p165, %p166
      %p168 = scmp.ne.s32.totalorder %s156, %s157
      %p169 = scmp.eq.s32.totalorder %s35, 1
      %p170 = por %p168, %p169
      %p172 = scmp.ne.s32.totalorder %s157, %s171
      %p173 = scmp.eq.s32.totalorder %s35, 0
      %p174 = por %p172, %p173
      %s176 = sadd.s32 %s175, 1
      %p179 = scmp.eq.s32.totalorder %s29, 1
      %p180 = scmp.ne.s32.totalorder %s175, %s177
      %p181 = scmp.eq.s32.totalorder %s29, 0
      %p182 = por %p180, %p181
      %p183 = scmp.ne.s32.totalorder %s175, %s177
      %p184 = scmp.eq.s32.totalorder %s34, 1
      %p185 = por %p183, %p184
      %p186 = scmp.ne.s32.totalorder %s177, %s178
      %p187 = scmp.eq.s32.totalorder %s34, 0
      %p188 = por %p186, %p187
      %p189 = scmp.ne.s32.totalorder %s177, %s178
      %p190 = scmp.eq.s32.totalorder %s35, 1
      %p191 = por %p189, %p190
      %p193 = scmp.ne.s32.totalorder %s178, %s192
      %p194 = scmp.eq.s32.totalorder %s35, 0
      %p195 = por %p193, %p194
      %s197 = sadd.s32 %s196, 1
      %p200 = scmp.eq.s32.totalorder %s29, 1
      %p201 = scmp.ne.s32.totalorder %s196, %s198
      %p202 = scmp.eq.s32.totalorder %s29, 0
      %p203 = por %p201, %p202
      %p204 = scmp.ne.s32.totalorder %s196, %s198
      %p205 = scmp.eq.s32.totalorder %s34, 1
      %p206 = por %p204, %p205
      %p207 = scmp.ne.s32.totalorder %s198, %s199
      %p208 = scmp.eq.s32.totalorder %s34, 0
      %p209 = por %p207, %p208
      %p210 = scmp.ne.s32.totalorder %s198, %s199
      %p211 = scmp.eq.s32.totalorder %s35, 1
      %p212 = por %p210, %p211
      %p214 = scmp.ne.s32.totalorder %s199, %s213
      %p215 = scmp.eq.s32.totalorder %s35, 0
      %p216 = por %p214, %p215
      %s218 = sadd.s32 %s217, 1
      %p221 = scmp.eq.s32.totalorder %s29, 1
      %p222 = scmp.ne.s32.totalorder %s217, %s219
      %p223 = scmp.eq.s32.totalorder %s29, 0
      %p224 = por %p222, %p223
      %p225 = scmp.ne.s32.totalorder %s217, %s219
      %p226 = scmp.eq.s32.totalorder %s34, 1
      %p227 = por %p225, %p226
      %p228 = scmp.ne.s32.totalorder %s219, %s220
      %p229 = scmp.eq.s32.totalorder %s34, 0
      %p230 = por %p228, %p229
      %p231 = scmp.ne.s32.totalorder %s219, %s220
      %p232 = scmp.eq.s32.totalorder %s35, 1
      %p233 = por %p231, %p232
      %p235 = scmp.ne.s32.totalorder %s220, %s234
      %p236 = scmp.eq.s32.totalorder %s35, 0
      %p237 = por %p235, %p236
      %s239 = sadd.s32 %s238, 1
      %p242 = scmp.eq.s32.totalorder %s29, 1
      %p243 = scmp.ne.s32.totalorder %s238, %s240
      %p244 = scmp.eq.s32.totalorder %s29, 0
      %p245 = por %p243, %p244
      %p246 = scmp.ne.s32.totalorder %s238, %s240
      %p247 = scmp.eq.s32.totalorder %s34, 1
      %p248 = por %p246, %p247
      %p249 = scmp.ne.s32.totalorder %s240, %s241
      %p250 = scmp.eq.s32.totalorder %s34, 0
      %p251 = por %p249, %p250
      %p252 = scmp.ne.s32.totalorder %s240, %s241
      %p253 = scmp.eq.s32.totalorder %s35, 1
      %p254 = por %p252, %p253
      %p256 = scmp.ne.s32.totalorder %s241, %s255
      %p257 = scmp.eq.s32.totalorder %s35, 0
      %p258 = por %p256, %p257
      %s260 = sadd.s32 %s259, 1
      %p263 = scmp.eq.s32.totalorder %s29, 1
      %p264 = scmp.ne.s32.totalorder %s259, %s261
      %p265 = scmp.eq.s32.totalorder %s29, 0
      %p266 = por %p264, %p265
      %p267 = scmp.ne.s32.totalorder %s259, %s261
      %p268 = scmp.eq.s32.totalorder %s34, 1
      %p269 = por %p267, %p268
      %p270 = scmp.ne.s32.totalorder %s261, %s262
      %p271 = scmp.eq.s32.totalorder %s34, 0
      %p272 = por %p270, %p271
      %p273 = scmp.ne.s32.totalorder %s261, %s262
      %p274 = scmp.eq.s32.totalorder %s35, 1
      %p275 = por %p273, %p274
      %p277 = scmp.ne.s32.totalorder %s262, %s276
      %p278 = scmp.eq.s32.totalorder %s35, 0
      %p279 = por %p277, %p278
      %s280 = ssub.s32 %s36, %s55
      %s281 = ssub.s32 %s37, %s51
      %s282 = sor.u32 %s280, %s281
      %p283 = scmp.eq.s32.totalorder %s282, 0
      %s285 = sadd.s32 %s284, 1
      %s286 = scalar_select %p283, %s284, %s285
      %p289 = pneg %p283
      %p290 = scmp.eq.s32.totalorder %s29, 1
      %p291 = por %p289, %p290
      %p292 = scmp.ne.s32.totalorder %s284, %s287
      %p293 = scmp.eq.s32.totalorder %s29, 0
      %p294 = por %p292, %p293
      %p295 = scmp.ne.s32.totalorder %s284, %s287
      %p296 = scmp.eq.s32.totalorder %s34, 1
      %p297 = por %p295, %p296
      %p298 = scmp.ne.s32.totalorder %s287, %s288
      %p299 = scmp.eq.s32.totalorder %s34, 0
      %p300 = por %p298, %p299
      %p301 = scmp.ne.s32.totalorder %s287, %s288
      %p302 = scmp.eq.s32.totalorder %s35, 1
      %p303 = por %p301, %p302
      %p305 = scmp.ne.s32.totalorder %s288, %s304
      %p306 = scmp.eq.s32.totalorder %s35, 0
      %p307 = por %p305, %p306
      %p308 = scmp.le.s32.totalorder 1, %s29
      %p309 = scmp.lt.s32.totalorder %s29, 3
      %p310 = pnand %p308, %p309
      %p311 = pneg %p310
      // Predicated region
      $region9: #{tpu_custom_call.1} parent=5 // pred_check
        _
      $region10: #{tpu_custom_call.1} parent=5 // pred_check_branch
        %313 = sbr.rel (%p310) target = $region12
      $region11: #{tpu_custom_call.1} parent=5 // pred_region
        %s314 = ssub.s32 %s29, 1
        // Predicated region
        $region13: #{tpu_custom_call.1} parent=11 // pred_check
          %p315 = pneg %p125
        $region14: #{tpu_custom_call.1} parent=11 // pred_check_branch
          %317 = sbr.rel (%p315) target = $region16
        $region15: #{tpu_custom_call.1} parent=11 // pred_region
          %s319 = ssub.s32 2048, 2048
          %320 = vsyncadd [#allocation10], %s319
          %s321 = sshll.u32 [#allocation11], 4
          %s322 = int_to_ptr.vmem [resolvable:$true] %s321
          %327 = dma.hbm_to_vmem [thread:$0]  %s2, 2048, %s322, [#allocation10], 128, 128, 8
        $region16: #{tpu_custom_call.1} parent=11 // pred_fallthru
          _
        // Predicated region
        $region17: #{tpu_custom_call.1} parent=11 // pred_check
          %p328 = pneg %p146
        $region18: #{tpu_custom_call.1} parent=11 // pred_check_branch
          %330 = sbr.rel (%p328) target = $region20
        $region19: #{tpu_custom_call.1} parent=11 // pred_region
          %s332 = ssub.s32 64, 64
          %333 = vsyncadd [#allocation13], %s332
          %s334 = sshll.u32 [#allocation12], 4
          %s335 = int_to_ptr.vmem [resolvable:$true] %s334
          %340 = dma.hbm_to_vmem [thread:$0]  %s3, 64, %s335, [#allocation13], 16, 16, 1
        $region20: #{tpu_custom_call.1} parent=11 // pred_fallthru
          _
        // Predicated region
        $region21: #{tpu_custom_call.1} parent=11 // pred_check
          %p341 = pneg %p167
        $region22: #{tpu_custom_call.1} parent=11 // pred_check_branch
          %343 = sbr.rel (%p341) target = $region24
        $region23: #{tpu_custom_call.1} parent=11 // pred_region
          %s345 = ssub.s32 1024, 1024
          %346 = vsyncadd [#allocation13], %s345
          %s347 = sshll.u32 [#allocation14], 4
          %s348 = int_to_ptr.vmem [resolvable:$true] %s347
          %353 = dma.hbm_to_vmem [thread:$0]  %s4, 1024, %s348, [#allocation13], 128, 128, 8
        $region24: #{tpu_custom_call.1} parent=11 // pred_fallthru
          _
        // Predicated region
        $region25: #{tpu_custom_call.1} parent=11 // pred_check
          %p354 = pneg %p188
        $region26: #{tpu_custom_call.1} parent=11 // pred_check_branch
          %356 = sbr.rel (%p354) target = $region28
        $region27: #{tpu_custom_call.1} parent=11 // pred_region
          %s358 = ssub.s32 64, 64
          %359 = vsyncadd [#allocation16], %s358
          %s360 = sshll.u32 [#allocation15], 4
          %s361 = int_to_ptr.vmem [resolvable:$true] %s360
          %366 = dma.hbm_to_vmem [thread:$0]  %s5, 64, %s361, [#allocation16], 16, 16, 1
        $region28: #{tpu_custom_call.1} parent=11 // pred_fallthru
          _
        // Predicated region
        $region29: #{tpu_custom_call.1} parent=11 // pred_check
          %p367 = pneg %p209
        $region30: #{tpu_custom_call.1} parent=11 // pred_check_branch
          %369 = sbr.rel (%p367) target = $region32
        $region31: #{tpu_custom_call.1} parent=11 // pred_region
          %s371 = ssub.s32 1024, 1024
          %372 = vsyncadd [#allocation16], %s371
          %s373 = sshll.u32 [#allocation17], 4
          %s374 = int_to_ptr.vmem [resolvable:$true] %s373
          %379 = dma.hbm_to_vmem [thread:$0]  %s6, 1024, %s374, [#allocation16], 128, 128, 8
        $region32: #{tpu_custom_call.1} parent=11 // pred_fallthru
          _
        // Predicated region
        $region33: #{tpu_custom_call.1} parent=11 // pred_check
          %p380 = pneg %p230
        $region34: #{tpu_custom_call.1} parent=11 // pred_check_branch
          %382 = sbr.rel (%p380) target = $region36
        $region35: #{tpu_custom_call.1} parent=11 // pred_region
          %s384 = ssub.s32 64, 64
          %385 = vsyncadd [#allocation19], %s384
          %s386 = sshll.u32 [#allocation18], 4
          %s387 = int_to_ptr.vmem [resolvable:$true] %s386
          %392 = dma.hbm_to_vmem [thread:$0]  %s7, 64, %s387, [#allocation19], 16, 16, 1
        $region36: #{tpu_custom_call.1} parent=11 // pred_fallthru
          _
        // Predicated region
        $region37: #{tpu_custom_call.1} parent=11 // pred_check
          %p393 = pneg %p251
        $region38: #{tpu_custom_call.1} parent=11 // pred_check_branch
          %395 = sbr.rel (%p393) target = $region40
        $region39: #{tpu_custom_call.1} parent=11 // pred_region
          %s397 = ssub.s32 512, 512
          %398 = vsyncadd [#allocation19], %s397
          %s399 = sshll.u32 [#allocation20], 4
          %s400 = int_to_ptr.vmem [resolvable:$true] %s399
          %405 = dma.hbm_to_vmem [thread:$0]  %s8, 512, %s400, [#allocation19], 128, 128, 8
        $region40: #{tpu_custom_call.1} parent=11 // pred_fallthru
          _
        // Predicated region
        $region41: #{tpu_custom_call.1} parent=11 // pred_check
          %p406 = pneg %p272
        $region42: #{tpu_custom_call.1} parent=11 // pred_check_branch
          %408 = sbr.rel (%p406) target = $region44
        $region43: #{tpu_custom_call.1} parent=11 // pred_region
          %s410 = ssub.s32 16, 16
          %411 = vsyncadd [#allocation22], %s410
          %s413 = sshll.u32 [#allocation21], 4
          %s414 = int_to_ptr.vmem [resolvable:$true] %s413
          %416 = dma.hbm_to_vmem [thread:$0]  %s9, 16, %s414, [#allocation22]
        $region44: #{tpu_custom_call.1} parent=11 // pred_fallthru
          _
      $region12: #{tpu_custom_call.1} parent=5 // pred_fallthru
        _
      %p417 = scmp.lt.s32.totalorder %s29, 2
      // Predicated region
      $region45: #{tpu_custom_call.1} parent=5 // pred_check
        %p418 = pneg %p417
      $region46: #{tpu_custom_call.1} parent=5 // pred_check_branch
        %420 = sbr.rel (%p418) target = $region48
      $region47: #{tpu_custom_call.1} parent=5 // pred_region
        // Predicated region
        $region49: #{tpu_custom_call.1} parent=47 // pred_check
          %p421 = pneg %p70
        $region50: #{tpu_custom_call.1} parent=47 // pred_check_branch
          %423 = sbr.rel (%p421) target = $region52
        $region51: #{tpu_custom_call.1} parent=47 // pred_region
          %s424 = sand.u32 %s60, 1
          %s425 = scalar_lea.sflag [#allocation7], %s424
          %s426 = sand.u32 %s60, 1
          %s427 = smul.addr %s426, 8
          %s428 = scalar_lea.vmem [#allocation6], %s427
          %s430 = ssub.s32 128, 128
          %431 = vsyncadd %s425, %s430
          %s432 = sadd.s32 %s37, %s36
          %s433 = smul.addr %s432, 128
          %s434 = scalar_lea.hbm %s0, %s433
          %s436 = sshll.u32 %s428, 4
          %s437 = int_to_ptr.vmem [resolvable:$true] %s436
          %439 = dma.hbm_to_vmem [thread:$0]  %s434, 128, %s437, %s425
        $region52: #{tpu_custom_call.1} parent=47 // pred_fallthru
          _
        // Predicated region
        $region53: #{tpu_custom_call.1} parent=47 // pred_check
          %p440 = pneg %p98
        $region54: #{tpu_custom_call.1} parent=47 // pred_check_branch
          %442 = sbr.rel (%p440) target = $region56
        $region55: #{tpu_custom_call.1} parent=47 // pred_region
          %s443 = sand.u32 %s29, 1
          %s444 = scalar_lea.sflag [#allocation10], %s443
          %s445 = sand.u32 %s88, 1
          %s446 = smul.addr %s445, 8
          %s447 = scalar_lea.vmem [#allocation9], %s446
          %s449 = ssub.s32 128, 128
          %450 = vsyncadd %s444, %s449
          %s451 = sadd.s32 %s38, %s36
          %s452 = smul.addr %s451, 128
          %s453 = scalar_lea.hbm %s1, %s452
          %s455 = sshll.u32 %s447, 4
          %s456 = int_to_ptr.vmem [resolvable:$true] %s455
          %458 = dma.hbm_to_vmem [thread:$0]  %s453, 128, %s456, %s444
        $region56: #{tpu_custom_call.1} parent=47 // pred_fallthru
          _
      $region48: #{tpu_custom_call.1} parent=5 // pred_fallthru
        _
      %p459 = scmp.le.s32.totalorder 1, %s29
      %p460 = scmp.lt.s32.totalorder %s29, 3
      %p461 = pnand %p459, %p460
      %p462 = pneg %p461
      // Predicated region
      $region57: #{tpu_custom_call.1} parent=5 // pred_check
        _
      $region58: #{tpu_custom_call.1} parent=5 // pred_check_branch
        %464 = sbr.rel (%p461) target = $region60
      $region59: #{tpu_custom_call.1} parent=5 // pred_region
        %s465 = ssub.s32 %s29, 1
        %s466 = sand.u32 %s63, 1
        %s467 = scalar_lea.sflag [#allocation7], %s466
        %s468 = sand.u32 %s63, 1
        %s469 = smul.addr %s468, 8
        %s470 = scalar_lea.vmem [#allocation6], %s469
        // Predicated region
        $region61: #{tpu_custom_call.1} parent=59 // pred_check
          %p471 = pneg %p76
        $region62: #{tpu_custom_call.1} parent=59 // pred_check_branch
          %473 = sbr.rel (%p471) target = $region64
        $region63: #{tpu_custom_call.1} parent=59 // pred_region
          %474 = dma.done %s467, 128
        $region64: #{tpu_custom_call.1} parent=59 // pred_fallthru
          _
        %s475 = sand.u32 %s34, 1
        %s476 = scalar_lea.sflag [#allocation10], %s475
        %s477 = sand.u32 %s91, 1
        %s478 = smul.addr %s477, 8
        %s479 = scalar_lea.vmem [#allocation9], %s478
        // Predicated region
        $region65: #{tpu_custom_call.1} parent=59 // pred_check
          %p480 = pneg %p104
        $region66: #{tpu_custom_call.1} parent=59 // pred_check_branch
          %482 = sbr.rel (%p480) target = $region68
        $region67: #{tpu_custom_call.1} parent=59 // pred_region
          %483 = dma.done %s476, 128
        $region68: #{tpu_custom_call.1} parent=59 // pred_fallthru
          _
        // Predicated region
        $region69: #{tpu_custom_call.1} parent=59 // pred_check
          %p484 = pneg %p125
        $region70: #{tpu_custom_call.1} parent=59 // pred_check_branch
          %486 = sbr.rel (%p484) target = $region72
        $region71: #{tpu_custom_call.1} parent=59 // pred_region
          %487 = dma.done [#allocation10], 2048
        $region72: #{tpu_custom_call.1} parent=59 // pred_fallthru
          _
        // Predicated region
        $region73: #{tpu_custom_call.1} parent=59 // pred_check
          %p488 = pneg %p146
        $region74: #{tpu_custom_call.1} parent=59 // pred_check_branch
          %490 = sbr.rel (%p488) target = $region76
        $region75: #{tpu_custom_call.1} parent=59 // pred_region
          %491 = dma.done [#allocation13], 64
        $region76: #{tpu_custom_call.1} parent=59 // pred_fallthru
          _
        // Predicated region
        $region77: #{tpu_custom_call.1} parent=59 // pred_check
          %p492 = pneg %p167
        $region78: #{tpu_custom_call.1} parent=59 // pred_check_branch
          %494 = sbr.rel (%p492) target = $region80
        $region79: #{tpu_custom_call.1} parent=59 // pred_region
          %495 = dma.done [#allocation13], 1024
        $region80: #{tpu_custom_call.1} parent=59 // pred_fallthru
          _
        // Predicated region
        $region81: #{tpu_custom_call.1} parent=59 // pred_check
          %p496 = pneg %p188
        $region82: #{tpu_custom_call.1} parent=59 // pred_check_branch
          %498 = sbr.rel (%p496) target = $region84
        $region83: #{tpu_custom_call.1} parent=59 // pred_region
          %499 = dma.done [#allocation16], 64
        $region84: #{tpu_custom_call.1} parent=59 // pred_fallthru
          _
        // Predicated region
        $region85: #{tpu_custom_call.1} parent=59 // pred_check
          %p500 = pneg %p209
        $region86: #{tpu_custom_call.1} parent=59 // pred_check_branch
          %502 = sbr.rel (%p500) target = $region88
        $region87: #{tpu_custom_call.1} parent=59 // pred_region
          %503 = dma.done [#allocation16], 1024
        $region88: #{tpu_custom_call.1} parent=59 // pred_fallthru
          _
        // Predicated region
        $region89: #{tpu_custom_call.1} parent=59 // pred_check
          %p504 = pneg %p230
        $region90: #{tpu_custom_call.1} parent=59 // pred_check_branch
          %506 = sbr.rel (%p504) target = $region92
        $region91: #{tpu_custom_call.1} parent=59 // pred_region
          %507 = dma.done [#allocation19], 64
        $region92: #{tpu_custom_call.1} parent=59 // pred_fallthru
          _
        // Predicated region
        $region93: #{tpu_custom_call.1} parent=59 // pred_check
          %p508 = pneg %p251
        $region94: #{tpu_custom_call.1} parent=59 // pred_check_branch
          %510 = sbr.rel (%p508) target = $region96
        $region95: #{tpu_custom_call.1} parent=59 // pred_region
          %511 = dma.done [#allocation19], 512
        $region96: #{tpu_custom_call.1} parent=59 // pred_fallthru
          _
        // Predicated region
        $region97: #{tpu_custom_call.1} parent=59 // pred_check
          %p512 = pneg %p272
        $region98: #{tpu_custom_call.1} parent=59 // pred_check_branch
          %514 = sbr.rel (%p512) target = $region100
        $region99: #{tpu_custom_call.1} parent=59 // pred_region
          %515 = dma.done [#allocation22], 16
        $region100: #{tpu_custom_call.1} parent=59 // pred_fallthru
          _
        %s516 = sand.u32 %s63, 1
        %s517 = scalar_lea.sflag [#allocation7], %s516
        %s518 = sand.u32 %s63, 1
        %s519 = smul.addr %s518, 8
        %s520 = scalar_lea.vmem [#allocation6], %s519
        %p521 = pneg %p76
        %p522 = pneg %p73
        %s523 = sand.u32 %s34, 1
        %s524 = scalar_lea.sflag [#allocation10], %s523
        %s525 = sand.u32 %s91, 1
        %s526 = smul.addr %s525, 8
        %s527 = scalar_lea.vmem [#allocation9], %s526
        %p528 = pneg %p104
        %p529 = pneg %p101
        %p530 = pneg %p125
        %p531 = pneg %p122
        %p532 = pneg %p146
        %p533 = pneg %p143
        %p534 = pneg %p167
        %p535 = pneg %p164
        %p536 = pneg %p188
        %p537 = pneg %p185
        %p538 = pneg %p209
        %p539 = pneg %p206
        %p540 = pneg %p230
        %p541 = pneg %p227
        %p542 = pneg %p251
        %p543 = pneg %p248
        %p544 = pneg %p272
        %p545 = pneg %p269
        %p546 = pneg %p300
        %p547 = pneg %p297
        %s548 = sand.u32 %s287, 1
        %s549 = scalar_lea.sflag [#allocation8], %s548
        %s550 = sand.u32 %s287, 1
        %s551 = smul.addr %s550, 8
        %s552 = scalar_lea.vmem [#allocation23], %s551
        %p553 = scmp.eq.s32.totalorder %s41, 0
        // Predicated region
        $region101: #{tpu_custom_call.1} parent=59 // pred_check
          %p554 = pneg %p553
        $region102: #{tpu_custom_call.1} parent=59 // pred_check_branch
          %556 = sbr.rel (%p554) target = $region104
        $region103: #{tpu_custom_call.1} parent=59 // pred_region
          %v557 = vld [vmem:[%s470] sm:$0xff]
          %v558 = vld [vmem:[#allocation11] sm:$0xff]
          %v559 = vld [vmem:[#allocation11 + $0x8] sm:$0xff]
          %v560 = vld [vmem:[#allocation11 + $0x10] sm:$0xff]
          %v561 = vld [vmem:[#allocation11 + $0x18] sm:$0xff]
          %v562 = vld [vmem:[#allocation11 + $0x20] sm:$0xff]
          %v563 = vld [vmem:[#allocation11 + $0x28] sm:$0xff]
          %v564 = vld [vmem:[#allocation11 + $0x30] sm:$0xff]
          %v565 = vld [vmem:[#allocation11 + $0x38] sm:$0xff]
          %v566 = vld [vmem:[#allocation11 + $0x40] sm:$0xff]
          %v567 = vld [vmem:[#allocation11 + $0x48] sm:$0xff]
          %v568 = vld [vmem:[#allocation11 + $0x50] sm:$0xff]
          %v569 = vld [vmem:[#allocation11 + $0x58] sm:$0xff]
          %v570 = vld [vmem:[#allocation11 + $0x60] sm:$0xff]
          %v571 = vld [vmem:[#allocation11 + $0x68] sm:$0xff]
          %v572 = vld [vmem:[#allocation11 + $0x70] sm:$0xff]
          %v573 = vld [vmem:[#allocation11 + $0x78] sm:$0xff]
          %v574 = vld [vmem:[#allocation12] sm:$0x1]
          %v575 = vld [vmem:[#allocation12 + $0x1] sm:$0x1]
          %v576 = vld [vmem:[#allocation12 + $0x2] sm:$0x1]
          %v577 = vld [vmem:[#allocation12 + $0x3] sm:$0x1]
          %v582 = vlaneseq
          %v583 = vshrl.u32 %v582, 7
          %v584 = vsub.s32 0, %v583
          %v585 = vrot.slane %v574, %v584
          %v586 = vlaneseq
          %v587 = vshrl.u32 %v586, 7
          %v588 = vsub.s32 0, %v587
          %v589 = vrot.slane %v575, %v588
          %v590 = vlaneseq
          %v591 = vshrl.u32 %v590, 7
          %v592 = vsub.s32 0, %v591
          %v593 = vrot.slane %v576, %v592
          %v594 = vlaneseq
          %v595 = vshrl.u32 %v594, 7
          %v596 = vsub.s32 0, %v595
          %v597 = vrot.slane %v577, %v596
          %vm602 = vcmask 261120
          %v604 = vsel %vm602, %v557, 0
          %606 = vmatprep.subr.mxu0 0.0
          %607 = vmatpush1.msra.mxu0 %v558
          %608 = vmatprep.subr.mxu0 0.0
          %609 = vmatpush1.msra.mxu0 %v559
          %610 = vmatprep.subr.mxu0 0.0
          %611 = vmatpush1.msra.mxu0 %v560
          %612 = vmatprep.subr.mxu0 0.0
          %613 = vmatpush1.msra.mxu0 %v561
          %614 = vmatprep.subr.mxu0 0.0
          %615 = vmatpush1.msra.mxu0 0.0
          %616 = vmatprep.subr.mxu0 0.0
          %617 = vmatpush1.msra.mxu0 0.0
          %618 = vmatprep.subr.mxu0 0.0
          %619 = vmatpush1.msra.mxu0 0.0
          %620 = vmatprep.subr.mxu0 0.0
          %621 = vmatpush1.msra.mxu0 0.0
          %622 = vmatprep.subr.mxu0 0.0
          %623 = vmatpush1.msra.mxu0 0.0
          %624 = vmatprep.subr.mxu0 0.0
          %625 = vmatpush1.msra.mxu0 0.0
          %626 = vmatprep.subr.mxu0 0.0
          %627 = vmatpush1.msra.mxu0 0.0
          %628 = vmatprep.subr.mxu0 0.0
          %629 = vmatpush1.msra.mxu0 0.0
          %630 = vmatprep.subr.mxu0 0.0
          %631 = vmatpush1.msra.mxu0 0.0
          %632 = vmatprep.subr.mxu0 0.0
          %633 = vmatpush1.msra.mxu0 0.0
          %634 = vmatprep.subr.mxu0 0.0
          %635 = vmatpush1.msra.mxu0 0.0
          %636 = vmatprep.subr.mxu0 0.0
          %637 = vmatpush1.msra.mxu0 0.0
          %638 = vmatprep.subr.mxu0 0.0
          %639 = vmatpush1.msra.mxu0 0.0
          %640 = vmatprep.subr.mxu0 0.0
          %641 = vmatpush1.msra.mxu0 0.0
          %642 = vmatprep.subr.mxu0 0.0
          %643 = vmatpush1.msra.mxu0 0.0
          %644 = vmatprep.subr.mxu0 0.0
          %645 = vmatpush1.msra.mxu0 0.0
          %646 = vmatprep.subr.mxu0 0.0
          %647 = vmatpush1.msra.mxu0 0.0
          %648 = vmatprep.subr.mxu0 0.0
          %649 = vmatpush1.msra.mxu0 0.0
          %650 = vmatprep.subr.mxu0 0.0
          %651 = vmatpush1.msra.mxu0 0.0
          %652 = vmatprep.subr.mxu0 0.0
          %653 = vmatpush1.msra.mxu0 0.0
          %654 = vmatprep.subr.mxu0 0.0
          %655 = vmatpush1.msra.mxu0 0.0
          %656 = vmatprep.subr.mxu0 0.0
          %657 = vmatpush1.msra.mxu0 0.0
          %658 = vmatprep.subr.mxu0 0.0
          %659 = vmatpush1.msra.mxu0 0.0
          %660 = vmatprep.subr.mxu0 0.0
          %661 = vmatpush1.msra.mxu0 0.0
          %662 = vmatprep.subr.mxu0 0.0
          %663 = vmatpush1.msra.mxu0 0.0
          %664 = vmatprep.subr.mxu0 0.0
          %665 = vmatpush1.msra.mxu0 0.0
          %666 = vmatprep.subr.mxu0 0.0
          %667 = vmatpush1.msra.mxu0 0.0
          %668 = vmatprep.subr.mxu0 0.0
          %669 = vmatpush1.msra.mxu0 0.0
          %670 = vmatprep.mubr.f32.mxu0 0.0
          %671 = vmatmul.mubr.f32.gmra.mrb[0].mxu0 %v604
          %v672 = vpop.f32.mrb[0].mxu0
          %v673 = vadd.f32 %v585, %v672
          %v674 = vpop.f32.mrb[0].mxu0
          %675 = vdwg.mxu0
          %676 = vmatprep.subr.mxu0 0.0
          %677 = vmatpush1.msra.mxu0 %v562
          %678 = vmatprep.subr.mxu0 0.0
          %679 = vmatpush1.msra.mxu0 %v563
          %680 = vmatprep.subr.mxu0 0.0
          %681 = vmatpush1.msra.mxu0 %v564
          %682 = vmatprep.subr.mxu0 0.0
          %683 = vmatpush1.msra.mxu0 %v565
          %684 = vmatprep.subr.mxu0 0.0
          %685 = vmatpush1.msra.mxu0 0.0
          %686 = vmatprep.subr.mxu0 0.0
          %687 = vmatpush1.msra.mxu0 0.0
          %688 = vmatprep.subr.mxu0 0.0
          %689 = vmatpush1.msra.mxu0 0.0
          %690 = vmatprep.subr.mxu0 0.0
          %691 = vmatpush1.msra.mxu0 0.0
          %692 = vmatprep.subr.mxu0 0.0
          %693 = vmatpush1.msra.mxu0 0.0
          %694 = vmatprep.subr.mxu0 0.0
          %695 = vmatpush1.msra.mxu0 0.0
          %696 = vmatprep.subr.mxu0 0.0
          %697 = vmatpush1.msra.mxu0 0.0
          %698 = vmatprep.subr.mxu0 0.0
          %699 = vmatpush1.msra.mxu0 0.0
          %700 = vmatprep.subr.mxu0 0.0
          %701 = vmatpush1.msra.mxu0 0.0
          %702 = vmatprep.subr.mxu0 0.0
          %703 = vmatpush1.msra.mxu0 0.0
          %704 = vmatprep.subr.mxu0 0.0
          %705 = vmatpush1.msra.mxu0 0.0
          %706 = vmatprep.subr.mxu0 0.0
          %707 = vmatpush1.msra.mxu0 0.0
          %708 = vmatprep.subr.mxu0 0.0
          %709 = vmatpush1.msra.mxu0 0.0
          %710 = vmatprep.subr.mxu0 0.0
          %711 = vmatpush1.msra.mxu0 0.0
          %712 = vmatprep.subr.mxu0 0.0
          %713 = vmatpush1.msra.mxu0 0.0
          %714 = vmatprep.subr.mxu0 0.0
          %715 = vmatpush1.msra.mxu0 0.0
          %716 = vmatprep.subr.mxu0 0.0
          %717 = vmatpush1.msra.mxu0 0.0
          %718 = vmatprep.subr.mxu0 0.0
          %719 = vmatpush1.msra.mxu0 0.0
          %720 = vmatprep.subr.mxu0 0.0
          %721 = vmatpush1.msra.mxu0 0.0
          %722 = vmatprep.subr.mxu0 0.0
          %723 = vmatpush1.msra.mxu0 0.0
          %724 = vmatprep.subr.mxu0 0.0
          %725 = vmatpush1.msra.mxu0 0.0
          %726 = vmatprep.subr.mxu0 0.0
          %727 = vmatpush1.msra.mxu0 0.0
          %728 = vmatprep.subr.mxu0 0.0
          %729 = vmatpush1.msra.mxu0 0.0
          %730 = vmatprep.subr.mxu0 0.0
          %731 = vmatpush1.msra.mxu0 0.0
          %732 = vmatprep.subr.mxu0 0.0
          %733 = vmatpush1.msra.mxu0 0.0
          %734 = vmatprep.subr.mxu0 0.0
          %735 = vmatpush1.msra.mxu0 0.0
          %736 = vmatprep.subr.mxu0 0.0
          %737 = vmatpush1.msra.mxu0 0.0
          %738 = vmatprep.subr.mxu0 0.0
          %739 = vmatpush1.msra.mxu0 0.0
          %740 = vmatprep.mubr.f32.mxu0 0.0
          %741 = vmatmul.mubr.f32.gmra.mrb[0].mxu0 %v604
          %v742 = vpop.f32.mrb[0].mxu0
          %v743 = vadd.f32 %v589, %v742
          %v744 = vpop.f32.mrb[0].mxu0
          %745 = vdwg.mxu0
          %746 = vmatprep.subr.mxu0 0.0
          %747 = vmatpush1.msra.mxu0 %v566
          %748 = vmatprep.subr.mxu0 0.0
          %749 = vmatpush1.msra.mxu0 %v567
          %750 = vmatprep.subr.mxu0 0.0
          %751 = vmatpush1.msra.mxu0 %v568
          %752 = vmatprep.subr.mxu0 0.0
          %753 = vmatpush1.msra.mxu0 %v569
          %754 = vmatprep.subr.mxu0 0.0
          %755 = vmatpush1.msra.mxu0 0.0
          %756 = vmatprep.subr.mxu0 0.0
          %757 = vmatpush1.msra.mxu0 0.0
          %758 = vmatprep.subr.mxu0 0.0
          %759 = vmatpush1.msra.mxu0 0.0
          %760 = vmatprep.subr.mxu0 0.0
          %761 = vmatpush1.msra.mxu0 0.0
          %762 = vmatprep.subr.mxu0 0.0
          %763 = vmatpush1.msra.mxu0 0.0
          %764 = vmatprep.subr.mxu0 0.0
          %765 = vmatpush1.msra.mxu0 0.0
          %766 = vmatprep.subr.mxu0 0.0
          %767 = vmatpush1.msra.mxu0 0.0
          %768 = vmatprep.subr.mxu0 0.0
          %769 = vmatpush1.msra.mxu0 0.0
          %770 = vmatprep.subr.mxu0 0.0
          %771 = vmatpush1.msra.mxu0 0.0
          %772 = vmatprep.subr.mxu0 0.0
          %773 = vmatpush1.msra.mxu0 0.0
          %774 = vmatprep.subr.mxu0 0.0
          %775 = vmatpush1.msra.mxu0 0.0
          %776 = vmatprep.subr.mxu0 0.0
          %777 = vmatpush1.msra.mxu0 0.0
          %778 = vmatprep.subr.mxu0 0.0
          %779 = vmatpush1.msra.mxu0 0.0
          %780 = vmatprep.subr.mxu0 0.0
          %781 = vmatpush1.msra.mxu0 0.0
          %782 = vmatprep.subr.mxu0 0.0
          %783 = vmatpush1.msra.mxu0 0.0
          %784 = vmatprep.subr.mxu0 0.0
          %785 = vmatpush1.msra.mxu0 0.0
          %786 = vmatprep.subr.mxu0 0.0
          %787 = vmatpush1.msra.mxu0 0.0
          %788 = vmatprep.subr.mxu0 0.0
          %789 = vmatpush1.msra.mxu0 0.0
          %790 = vmatprep.subr.mxu0 0.0
          %791 = vmatpush1.msra.mxu0 0.0
          %792 = vmatprep.subr.mxu0 0.0
          %793 = vmatpush1.msra.mxu0 0.0
          %794 = vmatprep.subr.mxu0 0.0
          %795 = vmatpush1.msra.mxu0 0.0
          %796 = vmatprep.subr.mxu0 0.0
          %797 = vmatpush1.msra.mxu0 0.0
          %798 = vmatprep.subr.mxu0 0.0
          %799 = vmatpush1.msra.mxu0 0.0
          %800 = vmatprep.subr.mxu0 0.0
          %801 = vmatpush1.msra.mxu0 0.0
          %802 = vmatprep.subr.mxu0 0.0
          %803 = vmatpush1.msra.mxu0 0.0
          %804 = vmatprep.subr.mxu0 0.0
          %805 = vmatpush1.msra.mxu0 0.0
          %806 = vmatprep.subr.mxu0 0.0
          %807 = vmatpush1.msra.mxu0 0.0
          %808 = vmatprep.subr.mxu0 0.0
          %809 = vmatpush1.msra.mxu0 0.0
          %810 = vmatprep.mubr.f32.mxu0 0.0
          %811 = vmatmul.mubr.f32.gmra.mrb[0].mxu0 %v604
          %v812 = vpop.f32.mrb[0].mxu0
          %v813 = vadd.f32 %v593, %v812
          %v814 = vpop.f32.mrb[0].mxu0
          %815 = vdwg.mxu0
          %816 = vmatprep.subr.mxu0 0.0
          %817 = vmatpush1.msra.mxu0 %v570
          %818 = vmatprep.subr.mxu0 0.0
          %819 = vmatpush1.msra.mxu0 %v571
          %820 = vmatprep.subr.mxu0 0.0
          %821 = vmatpush1.msra.mxu0 %v572
          %822 = vmatprep.subr.mxu0 0.0
          %823 = vmatpush1.msra.mxu0 %v573
          %824 = vmatprep.subr.mxu0 0.0
          %825 = vmatpush1.msra.mxu0 0.0
          %826 = vmatprep.subr.mxu0 0.0
          %827 = vmatpush1.msra.mxu0 0.0
          %828 = vmatprep.subr.mxu0 0.0
          %829 = vmatpush1.msra.mxu0 0.0
          %830 = vmatprep.subr.mxu0 0.0
          %831 = vmatpush1.msra.mxu0 0.0
          %832 = vmatprep.subr.mxu0 0.0
          %833 = vmatpush1.msra.mxu0 0.0
          %834 = vmatprep.subr.mxu0 0.0
          %835 = vmatpush1.msra.mxu0 0.0
          %836 = vmatprep.subr.mxu0 0.0
          %837 = vmatpush1.msra.mxu0 0.0
          %838 = vmatprep.subr.mxu0 0.0
          %839 = vmatpush1.msra.mxu0 0.0
          %840 = vmatprep.subr.mxu0 0.0
          %841 = vmatpush1.msra.mxu0 0.0
          %842 = vmatprep.subr.mxu0 0.0
          %843 = vmatpush1.msra.mxu0 0.0
          %844 = vmatprep.subr.mxu0 0.0
          %845 = vmatpush1.msra.mxu0 0.0
          %846 = vmatprep.subr.mxu0 0.0
          %847 = vmatpush1.msra.mxu0 0.0
          %848 = vmatprep.subr.mxu0 0.0
          %849 = vmatpush1.msra.mxu0 0.0
          %850 = vmatprep.subr.mxu0 0.0
          %851 = vmatpush1.msra.mxu0 0.0
          %852 = vmatprep.subr.mxu0 0.0
          %853 = vmatpush1.msra.mxu0 0.0
          %854 = vmatprep.subr.mxu0 0.0
          %855 = vmatpush1.msra.mxu0 0.0
          %856 = vmatprep.subr.mxu0 0.0
          %857 = vmatpush1.msra.mxu0 0.0
          %858 = vmatprep.subr.mxu0 0.0
          %859 = vmatpush1.msra.mxu0 0.0
          %860 = vmatprep.subr.mxu0 0.0
          %861 = vmatpush1.msra.mxu0 0.0
          %862 = vmatprep.subr.mxu0 0.0
          %863 = vmatpush1.msra.mxu0 0.0
          %864 = vmatprep.subr.mxu0 0.0
          %865 = vmatpush1.msra.mxu0 0.0
          %866 = vmatprep.subr.mxu0 0.0
          %867 = vmatpush1.msra.mxu0 0.0
          %868 = vmatprep.subr.mxu0 0.0
          %869 = vmatpush1.msra.mxu0 0.0
          %870 = vmatprep.subr.mxu0 0.0
          %871 = vmatpush1.msra.mxu0 0.0
          %872 = vmatprep.subr.mxu0 0.0
          %873 = vmatpush1.msra.mxu0 0.0
          %874 = vmatprep.subr.mxu0 0.0
          %875 = vmatpush1.msra.mxu0 0.0
          %876 = vmatprep.subr.mxu0 0.0
          %877 = vmatpush1.msra.mxu0 0.0
          %878 = vmatprep.subr.mxu0 0.0
          %879 = vmatpush1.msra.mxu0 0.0
          %880 = vmatprep.mubr.f32.mxu0 0.0
          %881 = vmatmul.mubr.f32.gmra.mrb[0].mxu0 %v604
          %v882 = vpop.f32.mrb[0].mxu0
          %v883 = vadd.f32 %v597, %v882
          %v884 = vpop.f32.mrb[0].mxu0
          %885 = vdwg.mxu0
          %v886 = vmul.f32 %v673, 0.35355338
          %v887 = vmul.f32 %v743, 0.35355338
          %v888 = vmul.f32 %v813, 0.35355338
          %v889 = vmul.f32 %v883, 0.35355338
          %vm890 = vcmask 64512
          %891 = vst.msk [vmem:[#allocation2] sm:$0xff] %vm890, %v886
          %892 = vst.msk [vmem:[#allocation2 + $0x8] sm:$0xff] %vm890, %v887
          %893 = vst.msk [vmem:[#allocation2 + $0x10] sm:$0xff] %vm890, %v888
          %894 = vst.msk [vmem:[#allocation2 + $0x18] sm:$0xff] %vm890, %v889
          %vm895 = vcmask 7168
          %896 = vst.msk [vmem:[#allocation3] sm:$0xff] %vm895, -inf
          %897 = vst.msk [vmem:[#allocation3 + $0x8] sm:$0xff] %vm895, -inf
          %898 = vst.msk [vmem:[#allocation3 + $0x10] sm:$0xff] %vm895, -inf
          %899 = vst.msk [vmem:[#allocation3 + $0x18] sm:$0xff] %vm895, -inf
          %900 = vst.msk [vmem:[#allocation4] sm:$0xff] %vm895, 0.0
          %901 = vst.msk [vmem:[#allocation4 + $0x8] sm:$0xff] %vm895, 0.0
          %902 = vst.msk [vmem:[#allocation4 + $0x10] sm:$0xff] %vm895, 0.0
          %903 = vst.msk [vmem:[#allocation4 + $0x18] sm:$0xff] %vm895, 0.0
          %904 = vst.msk [vmem:[#allocation5] sm:$0xff] %vm890, 0.0
          %905 = vst.msk [vmem:[#allocation5 + $0x8] sm:$0xff] %vm890, 0.0
          %906 = vst.msk [vmem:[#allocation5 + $0x10] sm:$0xff] %vm890, 0.0
          %907 = vst.msk [vmem:[#allocation5 + $0x18] sm:$0xff] %vm890, 0.0
        $region104: #{tpu_custom_call.1} parent=59 // pred_fallthru
          _
        %v908 = vld [vmem:[%s479] sm:$0xff]
        %v909 = vld [vmem:[#allocation14] sm:$0xff]
        %v910 = vld [vmem:[#allocation14 + $0x8] sm:$0xff]
        %v911 = vld [vmem:[#allocation14 + $0x10] sm:$0xff]
        %v912 = vld [vmem:[#allocation14 + $0x18] sm:$0xff]
        %v913 = vld [vmem:[#allocation14 + $0x20] sm:$0xff]
        %v914 = vld [vmem:[#allocation14 + $0x28] sm:$0xff]
        %v915 = vld [vmem:[#allocation14 + $0x30] sm:$0xff]
        %v916 = vld [vmem:[#allocation14 + $0x38] sm:$0xff]
        %v917 = vld [vmem:[#allocation15] sm:$0x1]
        %v918 = vld [vmem:[#allocation15 + $0x1] sm:$0x1]
        %v919 = vld [vmem:[#allocation15 + $0x2] sm:$0x1]
        %v920 = vld [vmem:[#allocation15 + $0x3] sm:$0x1]
        %v925 = vlaneseq
        %v926 = vshrl.u32 %v925, 7
        %v927 = vsub.s32 0, %v926
        %v928 = vrot.slane %v917, %v927
        %v929 = vlaneseq
        %v930 = vshrl.u32 %v929, 7
        %v931 = vsub.s32 0, %v930
        %v932 = vrot.slane %v918, %v931
        %v933 = vlaneseq
        %v934 = vshrl.u32 %v933, 7
        %v935 = vsub.s32 0, %v934
        %v936 = vrot.slane %v919, %v935
        %v937 = vlaneseq
        %v938 = vshrl.u32 %v937, 7
        %v939 = vsub.s32 0, %v938
        %v940 = vrot.slane %v920, %v939
        %vm945 = vcmask 130048
        %v947 = vsel %vm945, %v908, 0
        %949 = vmatprep.subr.mxu0 0.0
        %950 = vmatpush1.msra.mxu0 %v909
        %951 = vmatprep.subr.mxu0 0.0
        %952 = vmatpush1.msra.mxu0 %v910
        %953 = vmatprep.subr.mxu0 0.0
        %954 = vmatpush1.msra.mxu0 0.0
        %955 = vmatprep.subr.mxu0 0.0
        %956 = vmatpush1.msra.mxu0 0.0
        %957 = vmatprep.subr.mxu0 0.0
        %958 = vmatpush1.msra.mxu0 0.0
        %959 = vmatprep.subr.mxu0 0.0
        %960 = vmatpush1.msra.mxu0 0.0
        %961 = vmatprep.subr.mxu0 0.0
        %962 = vmatpush1.msra.mxu0 0.0
        %963 = vmatprep.subr.mxu0 0.0
        %964 = vmatpush1.msra.mxu0 0.0
        %965 = vmatprep.subr.mxu0 0.0
        %966 = vmatpush1.msra.mxu0 0.0
        %967 = vmatprep.subr.mxu0 0.0
        %968 = vmatpush1.msra.mxu0 0.0
        %969 = vmatprep.subr.mxu0 0.0
        %970 = vmatpush1.msra.mxu0 0.0
        %971 = vmatprep.subr.mxu0 0.0
        %972 = vmatpush1.msra.mxu0 0.0
        %973 = vmatprep.subr.mxu0 0.0
        %974 = vmatpush1.msra.mxu0 0.0
        %975 = vmatprep.subr.mxu0 0.0
        %976 = vmatpush1.msra.mxu0 0.0
        %977 = vmatprep.subr.mxu0 0.0
        %978 = vmatpush1.msra.mxu0 0.0
        %979 = vmatprep.subr.mxu0 0.0
        %980 = vmatpush1.msra.mxu0 0.0
        %981 = vmatprep.subr.mxu0 0.0
        %982 = vmatpush1.msra.mxu0 0.0
        %983 = vmatprep.subr.mxu0 0.0
        %984 = vmatpush1.msra.mxu0 0.0
        %985 = vmatprep.subr.mxu0 0.0
        %986 = vmatpush1.msra.mxu0 0.0
        %987 = vmatprep.subr.mxu0 0.0
        %988 = vmatpush1.msra.mxu0 0.0
        %989 = vmatprep.subr.mxu0 0.0
        %990 = vmatpush1.msra.mxu0 0.0
        %991 = vmatprep.subr.mxu0 0.0
        %992 = vmatpush1.msra.mxu0 0.0
        %993 = vmatprep.subr.mxu0 0.0
        %994 = vmatpush1.msra.mxu0 0.0
        %995 = vmatprep.subr.mxu0 0.0
        %996 = vmatpush1.msra.mxu0 0.0
        %997 = vmatprep.subr.mxu0 0.0
        %998 = vmatpush1.msra.mxu0 0.0
        %999 = vmatprep.subr.mxu0 0.0
        %1000 = vmatpush1.msra.mxu0 0.0
        %1001 = vmatprep.subr.mxu0 0.0
        %1002 = vmatpush1.msra.mxu0 0.0
        %1003 = vmatprep.subr.mxu0 0.0
        %1004 = vmatpush1.msra.mxu0 0.0
        %1005 = vmatprep.subr.mxu0 0.0
        %1006 = vmatpush1.msra.mxu0 0.0
        %1007 = vmatprep.subr.mxu0 0.0
        %1008 = vmatpush1.msra.mxu0 0.0
        %1009 = vmatprep.subr.mxu0 0.0
        %1010 = vmatpush1.msra.mxu0 0.0
        %1011 = vmatprep.subr.mxu0 0.0
        %1012 = vmatpush1.msra.mxu0 0.0
        %1013 = vmatprep.mubr.f32.mxu0 0.0
        %1014 = vmatmul.mubr.f32.gmra.mrb[0].mxu0 %v947
        %v1015 = vpop.f32.mrb[0].mxu0
        %v1016 = vadd.f32 %v928, %v1015
        %v1017 = vpop.f32.mrb[0].mxu0
        %1018 = vdwg.mxu0
        %1019 = vmatprep.subr.mxu0 0.0
        %1020 = vmatpush1.msra.mxu0 %v911
        %1021 = vmatprep.subr.mxu0 0.0
        %1022 = vmatpush1.msra.mxu0 %v912
        %1023 = vmatprep.subr.mxu0 0.0
        %1024 = vmatpush1.msra.mxu0 0.0
        %1025 = vmatprep.subr.mxu0 0.0
        %1026 = vmatpush1.msra.mxu0 0.0
        %1027 = vmatprep.subr.mxu0 0.0
        %1028 = vmatpush1.msra.mxu0 0.0
        %1029 = vmatprep.subr.mxu0 0.0
        %1030 = vmatpush1.msra.mxu0 0.0
        %1031 = vmatprep.subr.mxu0 0.0
        %1032 = vmatpush1.msra.mxu0 0.0
        %1033 = vmatprep.subr.mxu0 0.0
        %1034 = vmatpush1.msra.mxu0 0.0
        %1035 = vmatprep.subr.mxu0 0.0
        %1036 = vmatpush1.msra.mxu0 0.0
        %1037 = vmatprep.subr.mxu0 0.0
        %1038 = vmatpush1.msra.mxu0 0.0
        %1039 = vmatprep.subr.mxu0 0.0
        %1040 = vmatpush1.msra.mxu0 0.0
        %1041 = vmatprep.subr.mxu0 0.0
        %1042 = vmatpush1.msra.mxu0 0.0
        %1043 = vmatprep.subr.mxu0 0.0
        %1044 = vmatpush1.msra.mxu0 0.0
        %1045 = vmatprep.subr.mxu0 0.0
        %1046 = vmatpush1.msra.mxu0 0.0
        %1047 = vmatprep.subr.mxu0 0.0
        %1048 = vmatpush1.msra.mxu0 0.0
        %1049 = vmatprep.subr.mxu0 0.0
        %1050 = vmatpush1.msra.mxu0 0.0
        %1051 = vmatprep.subr.mxu0 0.0
        %1052 = vmatpush1.msra.mxu0 0.0
        %1053 = vmatprep.subr.mxu0 0.0
        %1054 = vmatpush1.msra.mxu0 0.0
        %1055 = vmatprep.subr.mxu0 0.0
        %1056 = vmatpush1.msra.mxu0 0.0
        %1057 = vmatprep.subr.mxu0 0.0
        %1058 = vmatpush1.msra.mxu0 0.0
        %1059 = vmatprep.subr.mxu0 0.0
        %1060 = vmatpush1.msra.mxu0 0.0
        %1061 = vmatprep.subr.mxu0 0.0
        %1062 = vmatpush1.msra.mxu0 0.0
        %1063 = vmatprep.subr.mxu0 0.0
        %1064 = vmatpush1.msra.mxu0 0.0
        %1065 = vmatprep.subr.mxu0 0.0
        %1066 = vmatpush1.msra.mxu0 0.0
        %1067 = vmatprep.subr.mxu0 0.0
        %1068 = vmatpush1.msra.mxu0 0.0
        %1069 = vmatprep.subr.mxu0 0.0
        %1070 = vmatpush1.msra.mxu0 0.0
        %1071 = vmatprep.subr.mxu0 0.0
        %1072 = vmatpush1.msra.mxu0 0.0
        %1073 = vmatprep.subr.mxu0 0.0
        %1074 = vmatpush1.msra.mxu0 0.0
        %1075 = vmatprep.subr.mxu0 0.0
        %1076 = vmatpush1.msra.mxu0 0.0
        %1077 = vmatprep.subr.mxu0 0.0
        %1078 = vmatpush1.msra.mxu0 0.0
        %1079 = vmatprep.subr.mxu0 0.0
        %1080 = vmatpush1.msra.mxu0 0.0
        %1081 = vmatprep.subr.mxu0 0.0
        %1082 = vmatpush1.msra.mxu0 0.0
        %1083 = vmatprep.mubr.f32.mxu0 0.0
        %1084 = vmatmul.mubr.f32.gmra.mrb[0].mxu0 %v947
        %v1085 = vpop.f32.mrb[0].mxu0
        %v1086 = vadd.f32 %v932, %v1085
        %v1087 = vpop.f32.mrb[0].mxu0
        %1088 = vdwg.mxu0
        %1089 = vmatprep.subr.mxu0 0.0
        %1090 = vmatpush1.msra.mxu0 %v913
        %1091 = vmatprep.subr.mxu0 0.0
        %1092 = vmatpush1.msra.mxu0 %v914
        %1093 = vmatprep.subr.mxu0 0.0
        %1094 = vmatpush1.msra.mxu0 0.0
        %1095 = vmatprep.subr.mxu0 0.0
        %1096 = vmatpush1.msra.mxu0 0.0
        %1097 = vmatprep.subr.mxu0 0.0
        %1098 = vmatpush1.msra.mxu0 0.0
        %1099 = vmatprep.subr.mxu0 0.0
        %1100 = vmatpush1.msra.mxu0 0.0
        %1101 = vmatprep.subr.mxu0 0.0
        %1102 = vmatpush1.msra.mxu0 0.0
        %1103 = vmatprep.subr.mxu0 0.0
        %1104 = vmatpush1.msra.mxu0 0.0
        %1105 = vmatprep.subr.mxu0 0.0
        %1106 = vmatpush1.msra.mxu0 0.0
        %1107 = vmatprep.subr.mxu0 0.0
        %1108 = vmatpush1.msra.mxu0 0.0
        %1109 = vmatprep.subr.mxu0 0.0
        %1110 = vmatpush1.msra.mxu0 0.0
        %1111 = vmatprep.subr.mxu0 0.0
        %1112 = vmatpush1.msra.mxu0 0.0
        %1113 = vmatprep.subr.mxu0 0.0
        %1114 = vmatpush1.msra.mxu0 0.0
        %1115 = vmatprep.subr.mxu0 0.0
        %1116 = vmatpush1.msra.mxu0 0.0
        %1117 = vmatprep.subr.mxu0 0.0
        %1118 = vmatpush1.msra.mxu0 0.0
        %1119 = vmatprep.subr.mxu0 0.0
        %1120 = vmatpush1.msra.mxu0 0.0
        %1121 = vmatprep.subr.mxu0 0.0
        %1122 = vmatpush1.msra.mxu0 0.0
        %1123 = vmatprep.subr.mxu0 0.0
        %1124 = vmatpush1.msra.mxu0 0.0
        %1125 = vmatprep.subr.mxu0 0.0
        %1126 = vmatpush1.msra.mxu0 0.0
        %1127 = vmatprep.subr.mxu0 0.0
        %1128 = vmatpush1.msra.mxu0 0.0
        %1129 = vmatprep.subr.mxu0 0.0
        %1130 = vmatpush1.msra.mxu0 0.0
        %1131 = vmatprep.subr.mxu0 0.0
        %1132 = vmatpush1.msra.mxu0 0.0
        %1133 = vmatprep.subr.mxu0 0.0
        %1134 = vmatpush1.msra.mxu0 0.0
        %1135 = vmatprep.subr.mxu0 0.0
        %1136 = vmatpush1.msra.mxu0 0.0
        %1137 = vmatprep.subr.mxu0 0.0
        %1138 = vmatpush1.msra.mxu0 0.0
        %1139 = vmatprep.subr.mxu0 0.0
        %1140 = vmatpush1.msra.mxu0 0.0
        %1141 = vmatprep.subr.mxu0 0.0
        %1142 = vmatpush1.msra.mxu0 0.0
        %1143 = vmatprep.subr.mxu0 0.0
        %1144 = vmatpush1.msra.mxu0 0.0
        %1145 = vmatprep.subr.mxu0 0.0
        %1146 = vmatpush1.msra.mxu0 0.0
        %1147 = vmatprep.subr.mxu0 0.0
        %1148 = vmatpush1.msra.mxu0 0.0
        %1149 = vmatprep.subr.mxu0 0.0
        %1150 = vmatpush1.msra.mxu0 0.0
        %1151 = vmatprep.subr.mxu0 0.0
        %1152 = vmatpush1.msra.mxu0 0.0
        %1153 = vmatprep.mubr.f32.mxu0 0.0
        %1154 = vmatmul.mubr.f32.gmra.mrb[0].mxu0 %v947
        %v1155 = vpop.f32.mrb[0].mxu0
        %v1156 = vadd.f32 %v936, %v1155
        %v1157 = vpop.f32.mrb[0].mxu0
        %1158 = vdwg.mxu0
        %1159 = vmatprep.subr.mxu0 0.0
        %1160 = vmatpush1.msra.mxu0 %v915
        %1161 = vmatprep.subr.mxu0 0.0
        %1162 = vmatpush1.msra.mxu0 %v916
        %1163 = vmatprep.subr.mxu0 0.0
        %1164 = vmatpush1.msra.mxu0 0.0
        %1165 = vmatprep.subr.mxu0 0.0
        %1166 = vmatpush1.msra.mxu0 0.0
        %1167 = vmatprep.subr.mxu0 0.0
        %1168 = vmatpush1.msra.mxu0 0.0
        %1169 = vmatprep.subr.mxu0 0.0
        %1170 = vmatpush1.msra.mxu0 0.0
        %1171 = vmatprep.subr.mxu0 0.0
        %1172 = vmatpush1.msra.mxu0 0.0
        %1173 = vmatprep.subr.mxu0 0.0
        %1174 = vmatpush1.msra.mxu0 0.0
        %1175 = vmatprep.subr.mxu0 0.0
        %1176 = vmatpush1.msra.mxu0 0.0
        %1177 = vmatprep.subr.mxu0 0.0
        %1178 = vmatpush1.msra.mxu0 0.0
        %1179 = vmatprep.subr.mxu0 0.0
        %1180 = vmatpush1.msra.mxu0 0.0
        %1181 = vmatprep.subr.mxu0 0.0
        %1182 = vmatpush1.msra.mxu0 0.0
        %1183 = vmatprep.subr.mxu0 0.0
        %1184 = vmatpush1.msra.mxu0 0.0
        %1185 = vmatprep.subr.mxu0 0.0
        %1186 = vmatpush1.msra.mxu0 0.0
        %1187 = vmatprep.subr.mxu0 0.0
        %1188 = vmatpush1.msra.mxu0 0.0
        %1189 = vmatprep.subr.mxu0 0.0
        %1190 = vmatpush1.msra.mxu0 0.0
        %1191 = vmatprep.subr.mxu0 0.0
        %1192 = vmatpush1.msra.mxu0 0.0
        %1193 = vmatprep.subr.mxu0 0.0
        %1194 = vmatpush1.msra.mxu0 0.0
        %1195 = vmatprep.subr.mxu0 0.0
        %1196 = vmatpush1.msra.mxu0 0.0
        %1197 = vmatprep.subr.mxu0 0.0
        %1198 = vmatpush1.msra.mxu0 0.0
        %1199 = vmatprep.subr.mxu0 0.0
        %1200 = vmatpush1.msra.mxu0 0.0
        %1201 = vmatprep.subr.mxu0 0.0
        %1202 = vmatpush1.msra.mxu0 0.0
        %1203 = vmatprep.subr.mxu0 0.0
        %1204 = vmatpush1.msra.mxu0 0.0
        %1205 = vmatprep.subr.mxu0 0.0
        %1206 = vmatpush1.msra.mxu0 0.0
        %1207 = vmatprep.subr.mxu0 0.0
        %1208 = vmatpush1.msra.mxu0 0.0
        %1209 = vmatprep.subr.mxu0 0.0
        %1210 = vmatpush1.msra.mxu0 0.0
        %1211 = vmatprep.subr.mxu0 0.0
        %1212 = vmatpush1.msra.mxu0 0.0
        %1213 = vmatprep.subr.mxu0 0.0
        %1214 = vmatpush1.msra.mxu0 0.0
        %1215 = vmatprep.subr.mxu0 0.0
        %1216 = vmatpush1.msra.mxu0 0.0
        %1217 = vmatprep.subr.mxu0 0.0
        %1218 = vmatpush1.msra.mxu0 0.0
        %1219 = vmatprep.subr.mxu0 0.0
        %1220 = vmatpush1.msra.mxu0 0.0
        %1221 = vmatprep.subr.mxu0 0.0
        %1222 = vmatpush1.msra.mxu0 0.0
        %1223 = vmatprep.mubr.f32.mxu0 0.0
        %1224 = vmatmul.mubr.f32.gmra.mrb[0].mxu0 %v947
        %v1225 = vpop.f32.mrb[0].mxu0
        %v1226 = vadd.f32 %v940, %v1225
        %v1227 = vpop.f32.mrb[0].mxu0
        %1228 = vdwg.mxu0
        %v1229 = vld [vmem:[#allocation17] sm:$0xff]
        %v1230 = vld [vmem:[#allocation17 + $0x8] sm:$0xff]
        %v1231 = vld [vmem:[#allocation17 + $0x10] sm:$0xff]
        %v1232 = vld [vmem:[#allocation17 + $0x18] sm:$0xff]
        %v1233 = vld [vmem:[#allocation17 + $0x20] sm:$0xff]
        %v1234 = vld [vmem:[#allocation17 + $0x28] sm:$0xff]
        %v1235 = vld [vmem:[#allocation17 + $0x30] sm:$0xff]
        %v1236 = vld [vmem:[#allocation17 + $0x38] sm:$0xff]
        %v1237 = vld [vmem:[#allocation18] sm:$0x1]
        %v1238 = vld [vmem:[#allocation18 + $0x1] sm:$0x1]
        %v1239 = vld [vmem:[#allocation18 + $0x2] sm:$0x1]
        %v1240 = vld [vmem:[#allocation18 + $0x3] sm:$0x1]
        %v1245 = vlaneseq
        %v1246 = vshrl.u32 %v1245, 7
        %v1247 = vsub.s32 0, %v1246
        %v1248 = vrot.slane %v1237, %v1247
        %v1249 = vlaneseq
        %v1250 = vshrl.u32 %v1249, 7
        %v1251 = vsub.s32 0, %v1250
        %v1252 = vrot.slane %v1238, %v1251
        %v1253 = vlaneseq
        %v1254 = vshrl.u32 %v1253, 7
        %v1255 = vsub.s32 0, %v1254
        %v1256 = vrot.slane %v1239, %v1255
        %v1257 = vlaneseq
        %v1258 = vshrl.u32 %v1257, 7
        %v1259 = vsub.s32 0, %v1258
        %v1260 = vrot.slane %v1240, %v1259
        %1265 = vmatprep.subr.mxu0 0.0
        %1266 = vmatpush1.msra.mxu0 %v1229
        %1267 = vmatprep.subr.mxu0 0.0
        %1268 = vmatpush1.msra.mxu0 %v1230
        %1269 = vmatprep.subr.mxu0 0.0
        %1270 = vmatpush1.msra.mxu0 0.0
        %1271 = vmatprep.subr.mxu0 0.0
        %1272 = vmatpush1.msra.mxu0 0.0
        %1273 = vmatprep.subr.mxu0 0.0
        %1274 = vmatpush1.msra.mxu0 0.0
        %1275 = vmatprep.subr.mxu0 0.0
        %1276 = vmatpush1.msra.mxu0 0.0
        %1277 = vmatprep.subr.mxu0 0.0
        %1278 = vmatpush1.msra.mxu0 0.0
        %1279 = vmatprep.subr.mxu0 0.0
        %1280 = vmatpush1.msra.mxu0 0.0
        %1281 = vmatprep.subr.mxu0 0.0
        %1282 = vmatpush1.msra.mxu0 0.0
        %1283 = vmatprep.subr.mxu0 0.0
        %1284 = vmatpush1.msra.mxu0 0.0
        %1285 = vmatprep.subr.mxu0 0.0
        %1286 = vmatpush1.msra.mxu0 0.0
        %1287 = vmatprep.subr.mxu0 0.0
        %1288 = vmatpush1.msra.mxu0 0.0
        %1289 = vmatprep.subr.mxu0 0.0
        %1290 = vmatpush1.msra.mxu0 0.0
        %1291 = vmatprep.subr.mxu0 0.0
        %1292 = vmatpush1.msra.mxu0 0.0
        %1293 = vmatprep.subr.mxu0 0.0
        %1294 = vmatpush1.msra.mxu0 0.0
        %1295 = vmatprep.subr.mxu0 0.0
        %1296 = vmatpush1.msra.mxu0 0.0
        %1297 = vmatprep.subr.mxu0 0.0
        %1298 = vmatpush1.msra.mxu0 0.0
        %1299 = vmatprep.subr.mxu0 0.0
        %1300 = vmatpush1.msra.mxu0 0.0
        %1301 = vmatprep.subr.mxu0 0.0
        %1302 = vmatpush1.msra.mxu0 0.0
        %1303 = vmatprep.subr.mxu0 0.0
        %1304 = vmatpush1.msra.mxu0 0.0
        %1305 = vmatprep.subr.mxu0 0.0
        %1306 = vmatpush1.msra.mxu0 0.0
        %1307 = vmatprep.subr.mxu0 0.0
        %1308 = vmatpush1.msra.mxu0 0.0
        %1309 = vmatprep.subr.mxu0 0.0
        %1310 = vmatpush1.msra.mxu0 0.0
        %1311 = vmatprep.subr.mxu0 0.0
        %1312 = vmatpush1.msra.mxu0 0.0
        %1313 = vmatprep.subr.mxu0 0.0
        %1314 = vmatpush1.msra.mxu0 0.0
        %1315 = vmatprep.subr.mxu0 0.0
        %1316 = vmatpush1.msra.mxu0 0.0
        %1317 = vmatprep.subr.mxu0 0.0
        %1318 = vmatpush1.msra.mxu0 0.0
        %1319 = vmatprep.subr.mxu0 0.0
        %1320 = vmatpush1.msra.mxu0 0.0
        %1321 = vmatprep.subr.mxu0 0.0
        %1322 = vmatpush1.msra.mxu0 0.0
        %1323 = vmatprep.subr.mxu0 0.0
        %1324 = vmatpush1.msra.mxu0 0.0
        %1325 = vmatprep.subr.mxu0 0.0
        %1326 = vmatpush1.msra.mxu0 0.0
        %1327 = vmatprep.subr.mxu0 0.0
        %1328 = vmatpush1.msra.mxu0 0.0
        %1329 = vmatprep.mubr.f32.mxu0 0.0
        %1330 = vmatmul.mubr.f32.gmra.mrb[0].mxu0 %v947
        %v1331 = vpop.f32.mrb[0].mxu0
        %v1332 = vadd.f32 %v1248, %v1331
        %v1333 = vpop.f32.mrb[0].mxu0
        %1334 = vdwg.mxu0
        %1335 = vmatprep.subr.mxu0 0.0
        %1336 = vmatpush1.msra.mxu0 %v1231
        %1337 = vmatprep.subr.mxu0 0.0
        %1338 = vmatpush1.msra.mxu0 %v1232
        %1339 = vmatprep.subr.mxu0 0.0
        %1340 = vmatpush1.msra.mxu0 0.0
        %1341 = vmatprep.subr.mxu0 0.0
        %1342 = vmatpush1.msra.mxu0 0.0
        %1343 = vmatprep.subr.mxu0 0.0
        %1344 = vmatpush1.msra.mxu0 0.0
        %1345 = vmatprep.subr.mxu0 0.0
        %1346 = vmatpush1.msra.mxu0 0.0
        %1347 = vmatprep.subr.mxu0 0.0
        %1348 = vmatpush1.msra.mxu0 0.0
        %1349 = vmatprep.subr.mxu0 0.0
        %1350 = vmatpush1.msra.mxu0 0.0
        %1351 = vmatprep.subr.mxu0 0.0
        %1352 = vmatpush1.msra.mxu0 0.0
        %1353 = vmatprep.subr.mxu0 0.0
        %1354 = vmatpush1.msra.mxu0 0.0
        %1355 = vmatprep.subr.mxu0 0.0
        %1356 = vmatpush1.msra.mxu0 0.0
        %1357 = vmatprep.subr.mxu0 0.0
        %1358 = vmatpush1.msra.mxu0 0.0
        %1359 = vmatprep.subr.mxu0 0.0
        %1360 = vmatpush1.msra.mxu0 0.0
        %1361 = vmatprep.subr.mxu0 0.0
        %1362 = vmatpush1.msra.mxu0 0.0
        %1363 = vmatprep.subr.mxu0 0.0
        %1364 = vmatpush1.msra.mxu0 0.0
        %1365 = vmatprep.subr.mxu0 0.0
        %1366 = vmatpush1.msra.mxu0 0.0
        %1367 = vmatprep.subr.mxu0 0.0
        %1368 = vmatpush1.msra.mxu0 0.0
        %1369 = vmatprep.subr.mxu0 0.0
        %1370 = vmatpush1.msra.mxu0 0.0
        %1371 = vmatprep.subr.mxu0 0.0
        %1372 = vmatpush1.msra.mxu0 0.0
        %1373 = vmatprep.subr.mxu0 0.0
        %1374 = vmatpush1.msra.mxu0 0.0
        %1375 = vmatprep.subr.mxu0 0.0
        %1376 = vmatpush1.msra.mxu0 0.0
        %1377 = vmatprep.subr.mxu0 0.0
        %1378 = vmatpush1.msra.mxu0 0.0
        %1379 = vmatprep.subr.mxu0 0.0
        %1380 = vmatpush1.msra.mxu0 0.0
        %1381 = vmatprep.subr.mxu0 0.0
        %1382 = vmatpush1.msra.mxu0 0.0
        %1383 = vmatprep.subr.mxu0 0.0
        %1384 = vmatpush1.msra.mxu0 0.0
        %1385 = vmatprep.subr.mxu0 0.0
        %1386 = vmatpush1.msra.mxu0 0.0
        %1387 = vmatprep.subr.mxu0 0.0
        %1388 = vmatpush1.msra.mxu0 0.0
        %1389 = vmatprep.subr.mxu0 0.0
        %1390 = vmatpush1.msra.mxu0 0.0
        %1391 = vmatprep.subr.mxu0 0.0
        %1392 = vmatpush1.msra.mxu0 0.0
        %1393 = vmatprep.subr.mxu0 0.0
        %1394 = vmatpush1.msra.mxu0 0.0
        %1395 = vmatprep.subr.mxu0 0.0
        %1396 = vmatpush1.msra.mxu0 0.0
        %1397 = vmatprep.subr.mxu0 0.0
        %1398 = vmatpush1.msra.mxu0 0.0
        %1399 = vmatprep.mubr.f32.mxu0 0.0
        %1400 = vmatmul.mubr.f32.gmra.mrb[0].mxu0 %v947
        %v1401 = vpop.f32.mrb[0].mxu0
        %v1402 = vadd.f32 %v1252, %v1401
        %v1403 = vpop.f32.mrb[0].mxu0
        %1404 = vdwg.mxu0
        %1405 = vmatprep.subr.mxu0 0.0
        %1406 = vmatpush1.msra.mxu0 %v1233
        %1407 = vmatprep.subr.mxu0 0.0
        %1408 = vmatpush1.msra.mxu0 %v1234
        %1409 = vmatprep.subr.mxu0 0.0
        %1410 = vmatpush1.msra.mxu0 0.0
        %1411 = vmatprep.subr.mxu0 0.0
        %1412 = vmatpush1.msra.mxu0 0.0
        %1413 = vmatprep.subr.mxu0 0.0
        %1414 = vmatpush1.msra.mxu0 0.0
        %1415 = vmatprep.subr.mxu0 0.0
        %1416 = vmatpush1.msra.mxu0 0.0
        %1417 = vmatprep.subr.mxu0 0.0
        %1418 = vmatpush1.msra.mxu0 0.0
        %1419 = vmatprep.subr.mxu0 0.0
        %1420 = vmatpush1.msra.mxu0 0.0
        %1421 = vmatprep.subr.mxu0 0.0
        %1422 = vmatpush1.msra.mxu0 0.0
        %1423 = vmatprep.subr.mxu0 0.0
        %1424 = vmatpush1.msra.mxu0 0.0
        %1425 = vmatprep.subr.mxu0 0.0
        %1426 = vmatpush1.msra.mxu0 0.0
        %1427 = vmatprep.subr.mxu0 0.0
        %1428 = vmatpush1.msra.mxu0 0.0
        %1429 = vmatprep.subr.mxu0 0.0
        %1430 = vmatpush1.msra.mxu0 0.0
        %1431 = vmatprep.subr.mxu0 0.0
        %1432 = vmatpush1.msra.mxu0 0.0
        %1433 = vmatprep.subr.mxu0 0.0
        %1434 = vmatpush1.msra.mxu0 0.0
        %1435 = vmatprep.subr.mxu0 0.0
        %1436 = vmatpush1.msra.mxu0 0.0
        %1437 = vmatprep.subr.mxu0 0.0
        %1438 = vmatpush1.msra.mxu0 0.0
        %1439 = vmatprep.subr.mxu0 0.0
        %1440 = vmatpush1.msra.mxu0 0.0
        %1441 = vmatprep.subr.mxu0 0.0
        %1442 = vmatpush1.msra.mxu0 0.0
        %1443 = vmatprep.subr.mxu0 0.0
        %1444 = vmatpush1.msra.mxu0 0.0
        %1445 = vmatprep.subr.mxu0 0.0
        %1446 = vmatpush1.msra.mxu0 0.0
        %1447 = vmatprep.subr.mxu0 0.0
        %1448 = vmatpush1.msra.mxu0 0.0
        %1449 = vmatprep.subr.mxu0 0.0
        %1450 = vmatpush1.msra.mxu0 0.0
        %1451 = vmatprep.subr.mxu0 0.0
        %1452 = vmatpush1.msra.mxu0 0.0
        %1453 = vmatprep.subr.mxu0 0.0
        %1454 = vmatpush1.msra.mxu0 0.0
        %1455 = vmatprep.subr.mxu0 0.0
        %1456 = vmatpush1.msra.mxu0 0.0
        %1457 = vmatprep.subr.mxu0 0.0
        %1458 = vmatpush1.msra.mxu0 0.0
        %1459 = vmatprep.subr.mxu0 0.0
        %1460 = vmatpush1.msra.mxu0 0.0
        %1461 = vmatprep.subr.mxu0 0.0
        %1462 = vmatpush1.msra.mxu0 0.0
        %1463 = vmatprep.subr.mxu0 0.0
        %1464 = vmatpush1.msra.mxu0 0.0
        %1465 = vmatprep.subr.mxu0 0.0
        %1466 = vmatpush1.msra.mxu0 0.0
        %1467 = vmatprep.subr.mxu0 0.0
        %1468 = vmatpush1.msra.mxu0 0.0
        %1469 = vmatprep.mubr.f32.mxu0 0.0
        %1470 = vmatmul.mubr.f32.gmra.mrb[0].mxu0 %v947
        %v1471 = vpop.f32.mrb[0].mxu0
        %v1472 = vadd.f32 %v1256, %v1471
        %v1473 = vpop.f32.mrb[0].mxu0
        %1474 = vdwg.mxu0
        %1475 = vmatprep.subr.mxu0 0.0
        %1476 = vmatpush1.msra.mxu0 %v1235
        %1477 = vmatprep.subr.mxu0 0.0
        %1478 = vmatpush1.msra.mxu0 %v1236
        %1479 = vmatprep.subr.mxu0 0.0
        %1480 = vmatpush1.msra.mxu0 0.0
        %1481 = vmatprep.subr.mxu0 0.0
        %1482 = vmatpush1.msra.mxu0 0.0
        %1483 = vmatprep.subr.mxu0 0.0
        %1484 = vmatpush1.msra.mxu0 0.0
        %1485 = vmatprep.subr.mxu0 0.0
        %1486 = vmatpush1.msra.mxu0 0.0
        %1487 = vmatprep.subr.mxu0 0.0
        %1488 = vmatpush1.msra.mxu0 0.0
        %1489 = vmatprep.subr.mxu0 0.0
        %1490 = vmatpush1.msra.mxu0 0.0
        %1491 = vmatprep.subr.mxu0 0.0
        %1492 = vmatpush1.msra.mxu0 0.0
        %1493 = vmatprep.subr.mxu0 0.0
        %1494 = vmatpush1.msra.mxu0 0.0
        %1495 = vmatprep.subr.mxu0 0.0
        %1496 = vmatpush1.msra.mxu0 0.0
        %1497 = vmatprep.subr.mxu0 0.0
        %1498 = vmatpush1.msra.mxu0 0.0
        %1499 = vmatprep.subr.mxu0 0.0
        %1500 = vmatpush1.msra.mxu0 0.0
        %1501 = vmatprep.subr.mxu0 0.0
        %1502 = vmatpush1.msra.mxu0 0.0
        %1503 = vmatprep.subr.mxu0 0.0
        %1504 = vmatpush1.msra.mxu0 0.0
        %1505 = vmatprep.subr.mxu0 0.0
        %1506 = vmatpush1.msra.mxu0 0.0
        %1507 = vmatprep.subr.mxu0 0.0
        %1508 = vmatpush1.msra.mxu0 0.0
        %1509 = vmatprep.subr.mxu0 0.0
        %1510 = vmatpush1.msra.mxu0 0.0
        %1511 = vmatprep.subr.mxu0 0.0
        %1512 = vmatpush1.msra.mxu0 0.0
        %1513 = vmatprep.subr.mxu0 0.0
        %1514 = vmatpush1.msra.mxu0 0.0
        %1515 = vmatprep.subr.mxu0 0.0
        %1516 = vmatpush1.msra.mxu0 0.0
        %1517 = vmatprep.subr.mxu0 0.0
        %1518 = vmatpush1.msra.mxu0 0.0
        %1519 = vmatprep.subr.mxu0 0.0
        %1520 = vmatpush1.msra.mxu0 0.0
        %1521 = vmatprep.subr.mxu0 0.0
        %1522 = vmatpush1.msra.mxu0 0.0
        %1523 = vmatprep.subr.mxu0 0.0
        %1524 = vmatpush1.msra.mxu0 0.0
        %1525 = vmatprep.subr.mxu0 0.0
        %1526 = vmatpush1.msra.mxu0 0.0
        %1527 = vmatprep.subr.mxu0 0.0
        %1528 = vmatpush1.msra.mxu0 0.0
        %1529 = vmatprep.subr.mxu0 0.0
        %1530 = vmatpush1.msra.mxu0 0.0
        %1531 = vmatprep.subr.mxu0 0.0
        %1532 = vmatpush1.msra.mxu0 0.0
        %1533 = vmatprep.subr.mxu0 0.0
        %1534 = vmatpush1.msra.mxu0 0.0
        %1535 = vmatprep.subr.mxu0 0.0
        %1536 = vmatpush1.msra.mxu0 0.0
        %1537 = vmatprep.subr.mxu0 0.0
        %1538 = vmatpush1.msra.mxu0 0.0
        %1539 = vmatprep.mubr.f32.mxu0 0.0
        %1540 = vmatmul.mubr.f32.gmra.mrb[0].mxu0 %v947
        %v1541 = vpop.f32.mrb[0].mxu0
        %v1542 = vadd.f32 %v1260, %v1541
        %v1543 = vpop.f32.mrb[0].mxu0
        %1544 = vdwg.mxu0
        %v1545 = vld [vmem:[#allocation2] sm:$0xff]
        %v1546 = vld [vmem:[#allocation2 + $0x8] sm:$0xff]
        %v1547 = vld [vmem:[#allocation2 + $0x10] sm:$0xff]
        %v1548 = vld [vmem:[#allocation2 + $0x18] sm:$0xff]
        %vm1549 = vcmask 64512
        %v1551 = vsel %vm1549, %v1545, 0
        %v1554 = vsel %vm1549, %v1016, 0
        %1556 = vmatprep.subr.mxu0 0.0
        %1557 = vmatpush1.xpose.msra.mxu0 %v1554
        %1558 = vmatprep.subr.mxu0 0.0
        %1559 = vmatpush1.xpose.msra.mxu0 0.0
        %1560 = vmatprep.subr.mxu0 0.0
        %1561 = vmatpush1.xpose.msra.mxu0 0.0
        %1562 = vmatprep.subr.mxu0 0.0
        %1563 = vmatpush1.xpose.msra.mxu0 0.0
        %1564 = vmatprep.subr.mxu0 0.0
        %1565 = vmatpush1.xpose.msra.mxu0 0.0
        %1566 = vmatprep.subr.mxu0 0.0
        %1567 = vmatpush1.xpose.msra.mxu0 0.0
        %1568 = vmatprep.subr.mxu0 0.0
        %1569 = vmatpush1.xpose.msra.mxu0 0.0
        %1570 = vmatprep.subr.mxu0 0.0
        %1571 = vmatpush1.xpose.msra.mxu0 0.0
        %1572 = vmatprep.subr.mxu0 0.0
        %1573 = vmatpush1.xpose.msra.mxu0 0.0
        %1574 = vmatprep.subr.mxu0 0.0
        %1575 = vmatpush1.xpose.msra.mxu0 0.0
        %1576 = vmatprep.subr.mxu0 0.0
        %1577 = vmatpush1.xpose.msra.mxu0 0.0
        %1578 = vmatprep.subr.mxu0 0.0
        %1579 = vmatpush1.xpose.msra.mxu0 0.0
        %1580 = vmatprep.subr.mxu0 0.0
        %1581 = vmatpush1.xpose.msra.mxu0 0.0
        %1582 = vmatprep.subr.mxu0 0.0
        %1583 = vmatpush1.xpose.msra.mxu0 0.0
        %1584 = vmatprep.subr.mxu0 0.0
        %1585 = vmatpush1.xpose.msra.mxu0 0.0
        %1586 = vmatprep.subr.mxu0 0.0
        %1587 = vmatpush1.xpose.msra.mxu0 0.0
        %1588 = vmatprep.subr.mxu0 0.0
        %1589 = vmatpush1.xpose.msra.mxu0 0.0
        %1590 = vmatprep.subr.mxu0 0.0
        %1591 = vmatpush1.xpose.msra.mxu0 0.0
        %1592 = vmatprep.subr.mxu0 0.0
        %1593 = vmatpush1.xpose.msra.mxu0 0.0
        %1594 = vmatprep.subr.mxu0 0.0
        %1595 = vmatpush1.xpose.msra.mxu0 0.0
        %1596 = vmatprep.subr.mxu0 0.0
        %1597 = vmatpush1.xpose.msra.mxu0 0.0
        %1598 = vmatprep.subr.mxu0 0.0
        %1599 = vmatpush1.xpose.msra.mxu0 0.0
        %1600 = vmatprep.subr.mxu0 0.0
        %1601 = vmatpush1.xpose.msra.mxu0 0.0
        %1602 = vmatprep.subr.mxu0 0.0
        %1603 = vmatpush1.xpose.msra.mxu0 0.0
        %1604 = vmatprep.subr.mxu0 0.0
        %1605 = vmatpush1.xpose.msra.mxu0 0.0
        %1606 = vmatprep.subr.mxu0 0.0
        %1607 = vmatpush1.xpose.msra.mxu0 0.0
        %1608 = vmatprep.subr.mxu0 0.0
        %1609 = vmatpush1.xpose.msra.mxu0 0.0
        %1610 = vmatprep.subr.mxu0 0.0
        %1611 = vmatpush1.xpose.msra.mxu0 0.0
        %1612 = vmatprep.subr.mxu0 0.0
        %1613 = vmatpush1.xpose.msra.mxu0 0.0
        %1614 = vmatprep.subr.mxu0 0.0
        %1615 = vmatpush1.xpose.msra.mxu0 0.0
        %1616 = vmatprep.subr.mxu0 0.0
        %1617 = vmatpush1.xpose.msra.mxu0 0.0
        %1618 = vmatprep.subr.mxu0 0.0
        %1619 = vmatpush1.xpose.msra.mxu0 0.0
        %1620 = vmatprep.mubr.f32.mxu0 0.0
        %1621 = vmatmul.mubr.f32.gmra.mrb[0].mxu0 %v1551
        %v1622 = vpop.f32.mrb[0].mxu0
        %v1623 = vadd.f32 0.0, %v1622
        %v1624 = vpop.f32.mrb[0].mxu0
        %1625 = vdwg.mxu0
        %v1627 = vsel %vm1549, %v1546, 0
        %v1630 = vsel %vm1549, %v1086, 0
        %1632 = vmatprep.subr.mxu0 0.0
        %1633 = vmatpush1.xpose.msra.mxu0 %v1630
        %1634 = vmatprep.subr.mxu0 0.0
        %1635 = vmatpush1.xpose.msra.mxu0 0.0
        %1636 = vmatprep.subr.mxu0 0.0
        %1637 = vmatpush1.xpose.msra.mxu0 0.0
        %1638 = vmatprep.subr.mxu0 0.0
        %1639 = vmatpush1.xpose.msra.mxu0 0.0
        %1640 = vmatprep.subr.mxu0 0.0
        %1641 = vmatpush1.xpose.msra.mxu0 0.0
        %1642 = vmatprep.subr.mxu0 0.0
        %1643 = vmatpush1.xpose.msra.mxu0 0.0
        %1644 = vmatprep.subr.mxu0 0.0
        %1645 = vmatpush1.xpose.msra.mxu0 0.0
        %1646 = vmatprep.subr.mxu0 0.0
        %1647 = vmatpush1.xpose.msra.mxu0 0.0
        %1648 = vmatprep.subr.mxu0 0.0
        %1649 = vmatpush1.xpose.msra.mxu0 0.0
        %1650 = vmatprep.subr.mxu0 0.0
        %1651 = vmatpush1.xpose.msra.mxu0 0.0
        %1652 = vmatprep.subr.mxu0 0.0
        %1653 = vmatpush1.xpose.msra.mxu0 0.0
        %1654 = vmatprep.subr.mxu0 0.0
        %1655 = vmatpush1.xpose.msra.mxu0 0.0
        %1656 = vmatprep.subr.mxu0 0.0
        %1657 = vmatpush1.xpose.msra.mxu0 0.0
        %1658 = vmatprep.subr.mxu0 0.0
        %1659 = vmatpush1.xpose.msra.mxu0 0.0
        %1660 = vmatprep.subr.mxu0 0.0
        %1661 = vmatpush1.xpose.msra.mxu0 0.0
        %1662 = vmatprep.subr.mxu0 0.0
        %1663 = vmatpush1.xpose.msra.mxu0 0.0
        %1664 = vmatprep.subr.mxu0 0.0
        %1665 = vmatpush1.xpose.msra.mxu0 0.0
        %1666 = vmatprep.subr.mxu0 0.0
        %1667 = vmatpush1.xpose.msra.mxu0 0.0
        %1668 = vmatprep.subr.mxu0 0.0
        %1669 = vmatpush1.xpose.msra.mxu0 0.0
        %1670 = vmatprep.subr.mxu0 0.0
        %1671 = vmatpush1.xpose.msra.mxu0 0.0
        %1672 = vmatprep.subr.mxu0 0.0
        %1673 = vmatpush1.xpose.msra.mxu0 0.0
        %1674 = vmatprep.subr.mxu0 0.0
        %1675 = vmatpush1.xpose.msra.mxu0 0.0
        %1676 = vmatprep.subr.mxu0 0.0
        %1677 = vmatpush1.xpose.msra.mxu0 0.0
        %1678 = vmatprep.subr.mxu0 0.0
        %1679 = vmatpush1.xpose.msra.mxu0 0.0
        %1680 = vmatprep.subr.mxu0 0.0
        %1681 = vmatpush1.xpose.msra.mxu0 0.0
        %1682 = vmatprep.subr.mxu0 0.0
        %1683 = vmatpush1.xpose.msra.mxu0 0.0
        %1684 = vmatprep.subr.mxu0 0.0
        %1685 = vmatpush1.xpose.msra.mxu0 0.0
        %1686 = vmatprep.subr.mxu0 0.0
        %1687 = vmatpush1.xpose.msra.mxu0 0.0
        %1688 = vmatprep.subr.mxu0 0.0
        %1689 = vmatpush1.xpose.msra.mxu0 0.0
        %1690 = vmatprep.subr.mxu0 0.0
        %1691 = vmatpush1.xpose.msra.mxu0 0.0
        %1692 = vmatprep.subr.mxu0 0.0
        %1693 = vmatpush1.xpose.msra.mxu0 0.0
        %1694 = vmatprep.subr.mxu0 0.0
        %1695 = vmatpush1.xpose.msra.mxu0 0.0
        %1696 = vmatprep.mubr.f32.mxu0 0.0
        %1697 = vmatmul.mubr.f32.gmra.mrb[0].mxu0 %v1627
        %v1698 = vpop.f32.mrb[0].mxu0
        %v1699 = vadd.f32 0.0, %v1698
        %v1700 = vpop.f32.mrb[0].mxu0
        %1701 = vdwg.mxu0
        %v1703 = vsel %vm1549, %v1547, 0
        %v1706 = vsel %vm1549, %v1156, 0
        %1708 = vmatprep.subr.mxu0 0.0
        %1709 = vmatpush1.xpose.msra.mxu0 %v1706
        %1710 = vmatprep.subr.mxu0 0.0
        %1711 = vmatpush1.xpose.msra.mxu0 0.0
        %1712 = vmatprep.subr.mxu0 0.0
        %1713 = vmatpush1.xpose.msra.mxu0 0.0
        %1714 = vmatprep.subr.mxu0 0.0
        %1715 = vmatpush1.xpose.msra.mxu0 0.0
        %1716 = vmatprep.subr.mxu0 0.0
        %1717 = vmatpush1.xpose.msra.mxu0 0.0
        %1718 = vmatprep.subr.mxu0 0.0
        %1719 = vmatpush1.xpose.msra.mxu0 0.0
        %1720 = vmatprep.subr.mxu0 0.0
        %1721 = vmatpush1.xpose.msra.mxu0 0.0
        %1722 = vmatprep.subr.mxu0 0.0
        %1723 = vmatpush1.xpose.msra.mxu0 0.0
        %1724 = vmatprep.subr.mxu0 0.0
        %1725 = vmatpush1.xpose.msra.mxu0 0.0
        %1726 = vmatprep.subr.mxu0 0.0
        %1727 = vmatpush1.xpose.msra.mxu0 0.0
        %1728 = vmatprep.subr.mxu0 0.0
        %1729 = vmatpush1.xpose.msra.mxu0 0.0
        %1730 = vmatprep.subr.mxu0 0.0
        %1731 = vmatpush1.xpose.msra.mxu0 0.0
        %1732 = vmatprep.subr.mxu0 0.0
        %1733 = vmatpush1.xpose.msra.mxu0 0.0
        %1734 = vmatprep.subr.mxu0 0.0
        %1735 = vmatpush1.xpose.msra.mxu0 0.0
        %1736 = vmatprep.subr.mxu0 0.0
        %1737 = vmatpush1.xpose.msra.mxu0 0.0
        %1738 = vmatprep.subr.mxu0 0.0
        %1739 = vmatpush1.xpose.msra.mxu0 0.0
        %1740 = vmatprep.subr.mxu0 0.0
        %1741 = vmatpush1.xpose.msra.mxu0 0.0
        %1742 = vmatprep.subr.mxu0 0.0
        %1743 = vmatpush1.xpose.msra.mxu0 0.0
        %1744 = vmatprep.subr.mxu0 0.0
        %1745 = vmatpush1.xpose.msra.mxu0 0.0
        %1746 = vmatprep.subr.mxu0 0.0
        %1747 = vmatpush1.xpose.msra.mxu0 0.0
        %1748 = vmatprep.subr.mxu0 0.0
        %1749 = vmatpush1.xpose.msra.mxu0 0.0
        %1750 = vmatprep.subr.mxu0 0.0
        %1751 = vmatpush1.xpose.msra.mxu0 0.0
        %1752 = vmatprep.subr.mxu0 0.0
        %1753 = vmatpush1.xpose.msra.mxu0 0.0
        %1754 = vmatprep.subr.mxu0 0.0
        %1755 = vmatpush1.xpose.msra.mxu0 0.0
        %1756 = vmatprep.subr.mxu0 0.0
        %1757 = vmatpush1.xpose.msra.mxu0 0.0
        %1758 = vmatprep.subr.mxu0 0.0
        %1759 = vmatpush1.xpose.msra.mxu0 0.0
        %1760 = vmatprep.subr.mxu0 0.0
        %1761 = vmatpush1.xpose.msra.mxu0 0.0
        %1762 = vmatprep.subr.mxu0 0.0
        %1763 = vmatpush1.xpose.msra.mxu0 0.0
        %1764 = vmatprep.subr.mxu0 0.0
        %1765 = vmatpush1.xpose.msra.mxu0 0.0
        %1766 = vmatprep.subr.mxu0 0.0
        %1767 = vmatpush1.xpose.msra.mxu0 0.0
        %1768 = vmatprep.subr.mxu0 0.0
        %1769 = vmatpush1.xpose.msra.mxu0 0.0
        %1770 = vmatprep.subr.mxu0 0.0
        %1771 = vmatpush1.xpose.msra.mxu0 0.0
        %1772 = vmatprep.mubr.f32.mxu0 0.0
        %1773 = vmatmul.mubr.f32.gmra.mrb[0].mxu0 %v1703
        %v1774 = vpop.f32.mrb[0].mxu0
        %v1775 = vadd.f32 0.0, %v1774
        %v1776 = vpop.f32.mrb[0].mxu0
        %1777 = vdwg.mxu0
        %v1779 = vsel %vm1549, %v1548, 0
        %v1782 = vsel %vm1549, %v1226, 0
        %1784 = vmatprep.subr.mxu0 0.0
        %1785 = vmatpush1.xpose.msra.mxu0 %v1782
        %1786 = vmatprep.subr.mxu0 0.0
        %1787 = vmatpush1.xpose.msra.mxu0 0.0
        %1788 = vmatprep.subr.mxu0 0.0
        %1789 = vmatpush1.xpose.msra.mxu0 0.0
        %1790 = vmatprep.subr.mxu0 0.0
        %1791 = vmatpush1.xpose.msra.mxu0 0.0
        %1792 = vmatprep.subr.mxu0 0.0
        %1793 = vmatpush1.xpose.msra.mxu0 0.0
        %1794 = vmatprep.subr.mxu0 0.0
        %1795 = vmatpush1.xpose.msra.mxu0 0.0
        %1796 = vmatprep.subr.mxu0 0.0
        %1797 = vmatpush1.xpose.msra.mxu0 0.0
        %1798 = vmatprep.subr.mxu0 0.0
        %1799 = vmatpush1.xpose.msra.mxu0 0.0
        %1800 = vmatprep.subr.mxu0 0.0
        %1801 = vmatpush1.xpose.msra.mxu0 0.0
        %1802 = vmatprep.subr.mxu0 0.0
        %1803 = vmatpush1.xpose.msra.mxu0 0.0
        %1804 = vmatprep.subr.mxu0 0.0
        %1805 = vmatpush1.xpose.msra.mxu0 0.0
        %1806 = vmatprep.subr.mxu0 0.0
        %1807 = vmatpush1.xpose.msra.mxu0 0.0
        %1808 = vmatprep.subr.mxu0 0.0
        %1809 = vmatpush1.xpose.msra.mxu0 0.0
        %1810 = vmatprep.subr.mxu0 0.0
        %1811 = vmatpush1.xpose.msra.mxu0 0.0
        %1812 = vmatprep.subr.mxu0 0.0
        %1813 = vmatpush1.xpose.msra.mxu0 0.0
        %1814 = vmatprep.subr.mxu0 0.0
        %1815 = vmatpush1.xpose.msra.mxu0 0.0
        %1816 = vmatprep.subr.mxu0 0.0
        %1817 = vmatpush1.xpose.msra.mxu0 0.0
        %1818 = vmatprep.subr.mxu0 0.0
        %1819 = vmatpush1.xpose.msra.mxu0 0.0
        %1820 = vmatprep.subr.mxu0 0.0
        %1821 = vmatpush1.xpose.msra.mxu0 0.0
        %1822 = vmatprep.subr.mxu0 0.0
        %1823 = vmatpush1.xpose.msra.mxu0 0.0
        %1824 = vmatprep.subr.mxu0 0.0
        %1825 = vmatpush1.xpose.msra.mxu0 0.0
        %1826 = vmatprep.subr.mxu0 0.0
        %1827 = vmatpush1.xpose.msra.mxu0 0.0
        %1828 = vmatprep.subr.mxu0 0.0
        %1829 = vmatpush1.xpose.msra.mxu0 0.0
        %1830 = vmatprep.subr.mxu0 0.0
        %1831 = vmatpush1.xpose.msra.mxu0 0.0
        %1832 = vmatprep.subr.mxu0 0.0
        %1833 = vmatpush1.xpose.msra.mxu0 0.0
        %1834 = vmatprep.subr.mxu0 0.0
        %1835 = vmatpush1.xpose.msra.mxu0 0.0
        %1836 = vmatprep.subr.mxu0 0.0
        %1837 = vmatpush1.xpose.msra.mxu0 0.0
        %1838 = vmatprep.subr.mxu0 0.0
        %1839 = vmatpush1.xpose.msra.mxu0 0.0
        %1840 = vmatprep.subr.mxu0 0.0
        %1841 = vmatpush1.xpose.msra.mxu0 0.0
        %1842 = vmatprep.subr.mxu0 0.0
        %1843 = vmatpush1.xpose.msra.mxu0 0.0
        %1844 = vmatprep.subr.mxu0 0.0
        %1845 = vmatpush1.xpose.msra.mxu0 0.0
        %1846 = vmatprep.subr.mxu0 0.0
        %1847 = vmatpush1.xpose.msra.mxu0 0.0
        %1848 = vmatprep.mubr.f32.mxu0 0.0
        %1849 = vmatmul.mubr.f32.gmra.mrb[0].mxu0 %v1779
        %v1850 = vpop.f32.mrb[0].mxu0
        %v1851 = vadd.f32 0.0, %v1850
        %v1852 = vpop.f32.mrb[0].mxu0
        %1853 = vdwg.mxu0
        %v1854 = vld [vmem:[#allocation3] sm:$0xff]
        %v1855 = vld [vmem:[#allocation3 + $0x8] sm:$0xff]
        %v1856 = vld [vmem:[#allocation3 + $0x10] sm:$0xff]
        %v1857 = vld [vmem:[#allocation3 + $0x18] sm:$0xff]
        %v1858 = vsel %vm1549, %v1623, -inf
        %1859 = vmax.xlane.f32.xlu0 %v1858
        %v1860 = vpop.xlane.xlu0 %1859
        %v1861 = vsel %vm1549, %v1699, -inf
        %1862 = vmax.xlane.f32.xlu0 %v1861
        %v1863 = vpop.xlane.xlu0 %1862
        %v1864 = vsel %vm1549, %v1775, -inf
        %1865 = vmax.xlane.f32.xlu0 %v1864
        %v1866 = vpop.xlane.xlu0 %1865
        %v1867 = vsel %vm1549, %v1851, -inf
        %1868 = vmax.xlane.f32.xlu0 %v1867
        %v1869 = vpop.xlane.xlu0 %1868
        %v1870 = vmax.f32 %v1854, %v1860
        %v1871 = vmax.f32 %v1855, %v1863
        %v1872 = vmax.f32 %v1856, %v1866
        %v1873 = vmax.f32 %v1857, %v1869
        %v1874 = vsub.f32 %v1854, %v1870
        %v1875 = vsub.f32 %v1855, %v1871
        %v1876 = vsub.f32 %v1856, %v1872
        %v1877 = vsub.f32 %v1857, %v1873
        %v1878 = vmul.f32 %v1874, 1.442695
        %v1879 = vpow.pop %v1878
        %v1880 = vmul.f32 %v1875, 1.442695
        %v1881 = vpow.pop %v1880
        %v1882 = vmul.f32 %v1876, 1.442695
        %v1883 = vpow.pop %v1882
        %v1884 = vmul.f32 %v1877, 1.442695
        %v1885 = vpow.pop %v1884
        %1887 = vset.pattern.permute.xlu0 0
        %1888 = vperm.xlu0 %1887, %v1870
        %v1889 = vpop.permute.xlu0 %1888
        %1892 = vset.pattern.permute.xlu0 0
        %1893 = vperm.xlu0 %1892, %v1871
        %v1894 = vpop.permute.xlu0 %1893
        %1897 = vset.pattern.permute.xlu0 0
        %1898 = vperm.xlu0 %1897, %v1872
        %v1899 = vpop.permute.xlu0 %1898
        %1902 = vset.pattern.permute.xlu0 0
        %1903 = vperm.xlu0 %1902, %v1873
        %v1904 = vpop.permute.xlu0 %1903
        %v1906 = vsub.f32 %v1623, %v1889
        %v1907 = vsub.f32 %v1699, %v1894
        %v1908 = vsub.f32 %v1775, %v1899
        %v1909 = vsub.f32 %v1851, %v1904
        %v1910 = vmul.f32 %v1906, 1.442695
        %v1911 = vpow.pop %v1910
        %v1912 = vmul.f32 %v1907, 1.442695
        %v1913 = vpow.pop %v1912
        %v1914 = vmul.f32 %v1908, 1.442695
        %v1915 = vpow.pop %v1914
        %v1916 = vmul.f32 %v1909, 1.442695
        %v1917 = vpow.pop %v1916
        %v1918 = vld [vmem:[#allocation4] sm:$0xff]
        %v1919 = vld [vmem:[#allocation4 + $0x8] sm:$0xff]
        %v1920 = vld [vmem:[#allocation4 + $0x10] sm:$0xff]
        %v1921 = vld [vmem:[#allocation4 + $0x18] sm:$0xff]
        %v1922 = vmul.f32 %v1879, %v1918
        %v1923 = vmul.f32 %v1881, %v1919
        %v1924 = vmul.f32 %v1883, %v1920
        %v1925 = vmul.f32 %v1885, %v1921
        %v1926 = vsel %vm1549, %v1911, 0.0
        %1927 = vadd.xlane.f32.xlu0 %v1926
        %v1928 = vpop.xlane.xlu0 %1927
        %v1929 = vsel %vm1549, %v1913, 0.0
        %1930 = vadd.xlane.f32.xlu0 %v1929
        %v1931 = vpop.xlane.xlu0 %1930
        %v1932 = vsel %vm1549, %v1915, 0.0
        %1933 = vadd.xlane.f32.xlu0 %v1932
        %v1934 = vpop.xlane.xlu0 %1933
        %v1935 = vsel %vm1549, %v1917, 0.0
        %1936 = vadd.xlane.f32.xlu0 %v1935
        %v1937 = vpop.xlane.xlu0 %1936
        %v1938 = vadd.f32 %v1922, %v1928
        %v1939 = vadd.f32 %v1923, %v1931
        %v1940 = vadd.f32 %v1924, %v1934
        %v1941 = vadd.f32 %v1925, %v1937
        %vm1942 = vcmask 7168
        %1943 = vst.msk [vmem:[#allocation4] sm:$0xff] %vm1942, %v1938
        %1944 = vst.msk [vmem:[#allocation4 + $0x8] sm:$0xff] %vm1942, %v1939
        %1945 = vst.msk [vmem:[#allocation4 + $0x10] sm:$0xff] %vm1942, %v1940
        %1946 = vst.msk [vmem:[#allocation4 + $0x18] sm:$0xff] %vm1942, %v1941
        %v1947 = vld [vmem:[#allocation5] sm:$0xff]
        %v1948 = vld [vmem:[#allocation5 + $0x8] sm:$0xff]
        %v1949 = vld [vmem:[#allocation5 + $0x10] sm:$0xff]
        %v1950 = vld [vmem:[#allocation5 + $0x18] sm:$0xff]
        %1952 = vset.pattern.permute.xlu0 0
        %1953 = vperm.xlu0 %1952, %v1879
        %v1954 = vpop.permute.xlu0 %1953
        %1957 = vset.pattern.permute.xlu0 0
        %1958 = vperm.xlu0 %1957, %v1881
        %v1959 = vpop.permute.xlu0 %1958
        %1962 = vset.pattern.permute.xlu0 0
        %1963 = vperm.xlu0 %1962, %v1883
        %v1964 = vpop.permute.xlu0 %1963
        %1967 = vset.pattern.permute.xlu0 0
        %1968 = vperm.xlu0 %1967, %v1885
        %v1969 = vpop.permute.xlu0 %1968
        %v1971 = vmul.f32 %v1954, %v1947
        %v1972 = vmul.f32 %v1959, %v1948
        %v1973 = vmul.f32 %v1964, %v1949
        %v1974 = vmul.f32 %v1969, %v1950
        %v1976 = vsel %vm1549, %v1911, 0
        %1978 = vmatprep.subr.mxu0 0.0
        %1979 = vmatpush1.msra.mxu0 %v1332
        %1980 = vmatprep.subr.mxu0 0.0
        %1981 = vmatpush1.msra.mxu0 0.0
        %1982 = vmatprep.subr.mxu0 0.0
        %1983 = vmatpush1.msra.mxu0 0.0
        %1984 = vmatprep.subr.mxu0 0.0
        %1985 = vmatpush1.msra.mxu0 0.0
        %1986 = vmatprep.subr.mxu0 0.0
        %1987 = vmatpush1.msra.mxu0 0.0
        %1988 = vmatprep.subr.mxu0 0.0
        %1989 = vmatpush1.msra.mxu0 0.0
        %1990 = vmatprep.subr.mxu0 0.0
        %1991 = vmatpush1.msra.mxu0 0.0
        %1992 = vmatprep.subr.mxu0 0.0
        %1993 = vmatpush1.msra.mxu0 0.0
        %1994 = vmatprep.subr.mxu0 0.0
        %1995 = vmatpush1.msra.mxu0 0.0
        %1996 = vmatprep.subr.mxu0 0.0
        %1997 = vmatpush1.msra.mxu0 0.0
        %1998 = vmatprep.subr.mxu0 0.0
        %1999 = vmatpush1.msra.mxu0 0.0
        %2000 = vmatprep.subr.mxu0 0.0
        %2001 = vmatpush1.msra.mxu0 0.0
        %2002 = vmatprep.subr.mxu0 0.0
        %2003 = vmatpush1.msra.mxu0 0.0
        %2004 = vmatprep.subr.mxu0 0.0
        %2005 = vmatpush1.msra.mxu0 0.0
        %2006 = vmatprep.subr.mxu0 0.0
        %2007 = vmatpush1.msra.mxu0 0.0
        %2008 = vmatprep.subr.mxu0 0.0
        %2009 = vmatpush1.msra.mxu0 0.0
        %2010 = vmatprep.subr.mxu0 0.0
        %2011 = vmatpush1.msra.mxu0 0.0
        %2012 = vmatprep.subr.mxu0 0.0
        %2013 = vmatpush1.msra.mxu0 0.0
        %2014 = vmatprep.subr.mxu0 0.0
        %2015 = vmatpush1.msra.mxu0 0.0
        %2016 = vmatprep.subr.mxu0 0.0
        %2017 = vmatpush1.msra.mxu0 0.0
        %2018 = vmatprep.subr.mxu0 0.0
        %2019 = vmatpush1.msra.mxu0 0.0
        %2020 = vmatprep.subr.mxu0 0.0
        %2021 = vmatpush1.msra.mxu0 0.0
        %2022 = vmatprep.subr.mxu0 0.0
        %2023 = vmatpush1.msra.mxu0 0.0
        %2024 = vmatprep.subr.mxu0 0.0
        %2025 = vmatpush1.msra.mxu0 0.0
        %2026 = vmatprep.subr.mxu0 0.0
        %2027 = vmatpush1.msra.mxu0 0.0
        %2028 = vmatprep.subr.mxu0 0.0
        %2029 = vmatpush1.msra.mxu0 0.0
        %2030 = vmatprep.subr.mxu0 0.0
        %2031 = vmatpush1.msra.mxu0 0.0
        %2032 = vmatprep.subr.mxu0 0.0
        %2033 = vmatpush1.msra.mxu0 0.0
        %2034 = vmatprep.subr.mxu0 0.0
        %2035 = vmatpush1.msra.mxu0 0.0
        %2036 = vmatprep.subr.mxu0 0.0
        %2037 = vmatpush1.msra.mxu0 0.0
        %2038 = vmatprep.subr.mxu0 0.0
        %2039 = vmatpush1.msra.mxu0 0.0
        %2040 = vmatprep.subr.mxu0 0.0
        %2041 = vmatpush1.msra.mxu0 0.0
        %2042 = vmatprep.mubr.f32.mxu0 0.0
        %2043 = vmatmul.mubr.f32.gmra.mrb[0].mxu0 %v1976
        %v2044 = vpop.f32.mrb[0].mxu0
        %v2045 = vadd.f32 0.0, %v2044
        %v2046 = vpop.f32.mrb[0].mxu0
        %2047 = vdwg.mxu0
        %v2049 = vsel %vm1549, %v1913, 0
        %2051 = vmatprep.subr.mxu0 0.0
        %2052 = vmatpush1.msra.mxu0 %v1402
        %2053 = vmatprep.subr.mxu0 0.0
        %2054 = vmatpush1.msra.mxu0 0.0
        %2055 = vmatprep.subr.mxu0 0.0
        %2056 = vmatpush1.msra.mxu0 0.0
        %2057 = vmatprep.subr.mxu0 0.0
        %2058 = vmatpush1.msra.mxu0 0.0
        %2059 = vmatprep.subr.mxu0 0.0
        %2060 = vmatpush1.msra.mxu0 0.0
        %2061 = vmatprep.subr.mxu0 0.0
        %2062 = vmatpush1.msra.mxu0 0.0
        %2063 = vmatprep.subr.mxu0 0.0
        %2064 = vmatpush1.msra.mxu0 0.0
        %2065 = vmatprep.subr.mxu0 0.0
        %2066 = vmatpush1.msra.mxu0 0.0
        %2067 = vmatprep.subr.mxu0 0.0
        %2068 = vmatpush1.msra.mxu0 0.0
        %2069 = vmatprep.subr.mxu0 0.0
        %2070 = vmatpush1.msra.mxu0 0.0
        %2071 = vmatprep.subr.mxu0 0.0
        %2072 = vmatpush1.msra.mxu0 0.0
        %2073 = vmatprep.subr.mxu0 0.0
        %2074 = vmatpush1.msra.mxu0 0.0
        %2075 = vmatprep.subr.mxu0 0.0
        %2076 = vmatpush1.msra.mxu0 0.0
        %2077 = vmatprep.subr.mxu0 0.0
        %2078 = vmatpush1.msra.mxu0 0.0
        %2079 = vmatprep.subr.mxu0 0.0
        %2080 = vmatpush1.msra.mxu0 0.0
        %2081 = vmatprep.subr.mxu0 0.0
        %2082 = vmatpush1.msra.mxu0 0.0
        %2083 = vmatprep.subr.mxu0 0.0
        %2084 = vmatpush1.msra.mxu0 0.0
        %2085 = vmatprep.subr.mxu0 0.0
        %2086 = vmatpush1.msra.mxu0 0.0
        %2087 = vmatprep.subr.mxu0 0.0
        %2088 = vmatpush1.msra.mxu0 0.0
        %2089 = vmatprep.subr.mxu0 0.0
        %2090 = vmatpush1.msra.mxu0 0.0
        %2091 = vmatprep.subr.mxu0 0.0
        %2092 = vmatpush1.msra.mxu0 0.0
        %2093 = vmatprep.subr.mxu0 0.0
        %2094 = vmatpush1.msra.mxu0 0.0
        %2095 = vmatprep.subr.mxu0 0.0
        %2096 = vmatpush1.msra.mxu0 0.0
        %2097 = vmatprep.subr.mxu0 0.0
        %2098 = vmatpush1.msra.mxu0 0.0
        %2099 = vmatprep.subr.mxu0 0.0
        %2100 = vmatpush1.msra.mxu0 0.0
        %2101 = vmatprep.subr.mxu0 0.0
        %2102 = vmatpush1.msra.mxu0 0.0
        %2103 = vmatprep.subr.mxu0 0.0
        %2104 = vmatpush1.msra.mxu0 0.0
        %2105 = vmatprep.subr.mxu0 0.0
        %2106 = vmatpush1.msra.mxu0 0.0
        %2107 = vmatprep.subr.mxu0 0.0
        %2108 = vmatpush1.msra.mxu0 0.0
        %2109 = vmatprep.subr.mxu0 0.0
        %2110 = vmatpush1.msra.mxu0 0.0
        %2111 = vmatprep.subr.mxu0 0.0
        %2112 = vmatpush1.msra.mxu0 0.0
        %2113 = vmatprep.subr.mxu0 0.0
        %2114 = vmatpush1.msra.mxu0 0.0
        %2115 = vmatprep.mubr.f32.mxu0 0.0
        %2116 = vmatmul.mubr.f32.gmra.mrb[0].mxu0 %v2049
        %v2117 = vpop.f32.mrb[0].mxu0
        %v2118 = vadd.f32 0.0, %v2117
        %v2119 = vpop.f32.mrb[0].mxu0
        %2120 = vdwg.mxu0
        %v2122 = vsel %vm1549, %v1915, 0
        %2124 = vmatprep.subr.mxu0 0.0
        %2125 = vmatpush1.msra.mxu0 %v1472
        %2126 = vmatprep.subr.mxu0 0.0
        %2127 = vmatpush1.msra.mxu0 0.0
        %2128 = vmatprep.subr.mxu0 0.0
        %2129 = vmatpush1.msra.mxu0 0.0
        %2130 = vmatprep.subr.mxu0 0.0
        %2131 = vmatpush1.msra.mxu0 0.0
        %2132 = vmatprep.subr.mxu0 0.0
        %2133 = vmatpush1.msra.mxu0 0.0
        %2134 = vmatprep.subr.mxu0 0.0
        %2135 = vmatpush1.msra.mxu0 0.0
        %2136 = vmatprep.subr.mxu0 0.0
        %2137 = vmatpush1.msra.mxu0 0.0
        %2138 = vmatprep.subr.mxu0 0.0
        %2139 = vmatpush1.msra.mxu0 0.0
        %2140 = vmatprep.subr.mxu0 0.0
        %2141 = vmatpush1.msra.mxu0 0.0
        %2142 = vmatprep.subr.mxu0 0.0
        %2143 = vmatpush1.msra.mxu0 0.0
        %2144 = vmatprep.subr.mxu0 0.0
        %2145 = vmatpush1.msra.mxu0 0.0
        %2146 = vmatprep.subr.mxu0 0.0
        %2147 = vmatpush1.msra.mxu0 0.0
        %2148 = vmatprep.subr.mxu0 0.0
        %2149 = vmatpush1.msra.mxu0 0.0
        %2150 = vmatprep.subr.mxu0 0.0
        %2151 = vmatpush1.msra.mxu0 0.0
        %2152 = vmatprep.subr.mxu0 0.0
        %2153 = vmatpush1.msra.mxu0 0.0
        %2154 = vmatprep.subr.mxu0 0.0
        %2155 = vmatpush1.msra.mxu0 0.0
        %2156 = vmatprep.subr.mxu0 0.0
        %2157 = vmatpush1.msra.mxu0 0.0
        %2158 = vmatprep.subr.mxu0 0.0
        %2159 = vmatpush1.msra.mxu0 0.0
        %2160 = vmatprep.subr.mxu0 0.0
        %2161 = vmatpush1.msra.mxu0 0.0
        %2162 = vmatprep.subr.mxu0 0.0
        %2163 = vmatpush1.msra.mxu0 0.0
        %2164 = vmatprep.subr.mxu0 0.0
        %2165 = vmatpush1.msra.mxu0 0.0
        %2166 = vmatprep.subr.mxu0 0.0
        %2167 = vmatpush1.msra.mxu0 0.0
        %2168 = vmatprep.subr.mxu0 0.0
        %2169 = vmatpush1.msra.mxu0 0.0
        %2170 = vmatprep.subr.mxu0 0.0
        %2171 = vmatpush1.msra.mxu0 0.0
        %2172 = vmatprep.subr.mxu0 0.0
        %2173 = vmatpush1.msra.mxu0 0.0
        %2174 = vmatprep.subr.mxu0 0.0
        %2175 = vmatpush1.msra.mxu0 0.0
        %2176 = vmatprep.subr.mxu0 0.0
        %2177 = vmatpush1.msra.mxu0 0.0
        %2178 = vmatprep.subr.mxu0 0.0
        %2179 = vmatpush1.msra.mxu0 0.0
        %2180 = vmatprep.subr.mxu0 0.0
        %2181 = vmatpush1.msra.mxu0 0.0
        %2182 = vmatprep.subr.mxu0 0.0
        %2183 = vmatpush1.msra.mxu0 0.0
        %2184 = vmatprep.subr.mxu0 0.0
        %2185 = vmatpush1.msra.mxu0 0.0
        %2186 = vmatprep.subr.mxu0 0.0
        %2187 = vmatpush1.msra.mxu0 0.0
        %2188 = vmatprep.mubr.f32.mxu0 0.0
        %2189 = vmatmul.mubr.f32.gmra.mrb[0].mxu0 %v2122
        %v2190 = vpop.f32.mrb[0].mxu0
        %v2191 = vadd.f32 0.0, %v2190
        %v2192 = vpop.f32.mrb[0].mxu0
        %2193 = vdwg.mxu0
        %v2195 = vsel %vm1549, %v1917, 0
        %2197 = vmatprep.subr.mxu0 0.0
        %2198 = vmatpush1.msra.mxu0 %v1542
        %2199 = vmatprep.subr.mxu0 0.0
        %2200 = vmatpush1.msra.mxu0 0.0
        %2201 = vmatprep.subr.mxu0 0.0
        %2202 = vmatpush1.msra.mxu0 0.0
        %2203 = vmatprep.subr.mxu0 0.0
        %2204 = vmatpush1.msra.mxu0 0.0
        %2205 = vmatprep.subr.mxu0 0.0
        %2206 = vmatpush1.msra.mxu0 0.0
        %2207 = vmatprep.subr.mxu0 0.0
        %2208 = vmatpush1.msra.mxu0 0.0
        %2209 = vmatprep.subr.mxu0 0.0
        %2210 = vmatpush1.msra.mxu0 0.0
        %2211 = vmatprep.subr.mxu0 0.0
        %2212 = vmatpush1.msra.mxu0 0.0
        %2213 = vmatprep.subr.mxu0 0.0
        %2214 = vmatpush1.msra.mxu0 0.0
        %2215 = vmatprep.subr.mxu0 0.0
        %2216 = vmatpush1.msra.mxu0 0.0
        %2217 = vmatprep.subr.mxu0 0.0
        %2218 = vmatpush1.msra.mxu0 0.0
        %2219 = vmatprep.subr.mxu0 0.0
        %2220 = vmatpush1.msra.mxu0 0.0
        %2221 = vmatprep.subr.mxu0 0.0
        %2222 = vmatpush1.msra.mxu0 0.0
        %2223 = vmatprep.subr.mxu0 0.0
        %2224 = vmatpush1.msra.mxu0 0.0
        %2225 = vmatprep.subr.mxu0 0.0
        %2226 = vmatpush1.msra.mxu0 0.0
        %2227 = vmatprep.subr.mxu0 0.0
        %2228 = vmatpush1.msra.mxu0 0.0
        %2229 = vmatprep.subr.mxu0 0.0
        %2230 = vmatpush1.msra.mxu0 0.0
        %2231 = vmatprep.subr.mxu0 0.0
        %2232 = vmatpush1.msra.mxu0 0.0
        %2233 = vmatprep.subr.mxu0 0.0
        %2234 = vmatpush1.msra.mxu0 0.0
        %2235 = vmatprep.subr.mxu0 0.0
        %2236 = vmatpush1.msra.mxu0 0.0
        %2237 = vmatprep.subr.mxu0 0.0
        %2238 = vmatpush1.msra.mxu0 0.0
        %2239 = vmatprep.subr.mxu0 0.0
        %2240 = vmatpush1.msra.mxu0 0.0
        %2241 = vmatprep.subr.mxu0 0.0
        %2242 = vmatpush1.msra.mxu0 0.0
        %2243 = vmatprep.subr.mxu0 0.0
        %2244 = vmatpush1.msra.mxu0 0.0
        %2245 = vmatprep.subr.mxu0 0.0
        %2246 = vmatpush1.msra.mxu0 0.0
        %2247 = vmatprep.subr.mxu0 0.0
        %2248 = vmatpush1.msra.mxu0 0.0
        %2249 = vmatprep.subr.mxu0 0.0
        %2250 = vmatpush1.msra.mxu0 0.0
        %2251 = vmatprep.subr.mxu0 0.0
        %2252 = vmatpush1.msra.mxu0 0.0
        %2253 = vmatprep.subr.mxu0 0.0
        %2254 = vmatpush1.msra.mxu0 0.0
        %2255 = vmatprep.subr.mxu0 0.0
        %2256 = vmatpush1.msra.mxu0 0.0
        %2257 = vmatprep.subr.mxu0 0.0
        %2258 = vmatpush1.msra.mxu0 0.0
        %2259 = vmatprep.subr.mxu0 0.0
        %2260 = vmatpush1.msra.mxu0 0.0
        %2261 = vmatprep.mubr.f32.mxu0 0.0
        %2262 = vmatmul.mubr.f32.gmra.mrb[0].mxu0 %v2195
        %v2263 = vpop.f32.mrb[0].mxu0
        %v2264 = vadd.f32 0.0, %v2263
        %v2265 = vpop.f32.mrb[0].mxu0
        %2266 = vdwg.mxu0
        %v2267 = vadd.f32 %v1971, %v2045
        %v2268 = vadd.f32 %v1972, %v2118
        %v2269 = vadd.f32 %v1973, %v2191
        %v2270 = vadd.f32 %v1974, %v2264
        %2271 = vst.msk [vmem:[#allocation5] sm:$0xff] %vm1549, %v2267
        %2272 = vst.msk [vmem:[#allocation5 + $0x8] sm:$0xff] %vm1549, %v2268
        %2273 = vst.msk [vmem:[#allocation5 + $0x10] sm:$0xff] %vm1549, %v2269
        %2274 = vst.msk [vmem:[#allocation5 + $0x18] sm:$0xff] %vm1549, %v2270
        %2275 = vst.msk [vmem:[#allocation3] sm:$0xff] %vm1942, %v1870
        %2276 = vst.msk [vmem:[#allocation3 + $0x8] sm:$0xff] %vm1942, %v1871
        %2277 = vst.msk [vmem:[#allocation3 + $0x10] sm:$0xff] %vm1942, %v1872
        %2278 = vst.msk [vmem:[#allocation3 + $0x18] sm:$0xff] %vm1942, %v1873
        // Predicated region
        $region105: #{tpu_custom_call.1} parent=59 // pred_check
          %p2279 = pneg %p553
        $region106: #{tpu_custom_call.1} parent=59 // pred_check_branch
          %2281 = sbr.rel (%p2279) target = $region108
        $region107: #{tpu_custom_call.1} parent=59 // pred_region
          %v2282 = vld [vmem:[#allocation4] sm:$0xff]
          %v2283 = vld [vmem:[#allocation4 + $0x8] sm:$0xff]
          %v2284 = vld [vmem:[#allocation4 + $0x10] sm:$0xff]
          %v2285 = vld [vmem:[#allocation4 + $0x18] sm:$0xff]
          %v2286 = vrcp.pop %v2282
          %v2287 = vrcp.pop %v2283
          %v2288 = vrcp.pop %v2284
          %v2289 = vrcp.pop %v2285
          %v2290 = vld [vmem:[#allocation5] sm:$0xff]
          %v2291 = vld [vmem:[#allocation5 + $0x8] sm:$0xff]
          %v2292 = vld [vmem:[#allocation5 + $0x10] sm:$0xff]
          %v2293 = vld [vmem:[#allocation5 + $0x18] sm:$0xff]
          %2295 = vset.pattern.permute.xlu0 0
          %2296 = vperm.xlu0 %2295, %v2286
          %v2297 = vpop.permute.xlu0 %2296
          %2300 = vset.pattern.permute.xlu0 0
          %2301 = vperm.xlu0 %2300, %v2287
          %v2302 = vpop.permute.xlu0 %2301
          %2305 = vset.pattern.permute.xlu0 0
          %2306 = vperm.xlu0 %2305, %v2288
          %v2307 = vpop.permute.xlu0 %2306
          %2310 = vset.pattern.permute.xlu0 0
          %2311 = vperm.xlu0 %2310, %v2289
          %v2312 = vpop.permute.xlu0 %2311
          %v2314 = vmul.f32 %v2290, %v2297
          %v2315 = vmul.f32 %v2291, %v2302
          %v2316 = vmul.f32 %v2292, %v2307
          %v2317 = vmul.f32 %v2293, %v2312
          %v2318 = vld [vmem:[#allocation20] sm:$0xff]
          %v2319 = vld [vmem:[#allocation20 + $0x8] sm:$0xff]
          %v2320 = vld [vmem:[#allocation20 + $0x10] sm:$0xff]
          %v2321 = vld [vmem:[#allocation20 + $0x18] sm:$0xff]
          %v2323 = vsel %vm1549, %v2314, 0
          %2325 = vmatprep.subr.mxu0 0.0
          %2326 = vmatpush1.msra.mxu0 %v2318
          %2327 = vmatprep.subr.mxu0 0.0
          %2328 = vmatpush1.msra.mxu0 0.0
          %2329 = vmatprep.subr.mxu0 0.0
          %2330 = vmatpush1.msra.mxu0 0.0
          %2331 = vmatprep.subr.mxu0 0.0
          %2332 = vmatpush1.msra.mxu0 0.0
          %2333 = vmatprep.subr.mxu0 0.0
          %2334 = vmatpush1.msra.mxu0 0.0
          %2335 = vmatprep.subr.mxu0 0.0
          %2336 = vmatpush1.msra.mxu0 0.0
          %2337 = vmatprep.subr.mxu0 0.0
          %2338 = vmatpush1.msra.mxu0 0.0
          %2339 = vmatprep.subr.mxu0 0.0
          %2340 = vmatpush1.msra.mxu0 0.0
          %2341 = vmatprep.subr.mxu0 0.0
          %2342 = vmatpush1.msra.mxu0 0.0
          %2343 = vmatprep.subr.mxu0 0.0
          %2344 = vmatpush1.msra.mxu0 0.0
          %2345 = vmatprep.subr.mxu0 0.0
          %2346 = vmatpush1.msra.mxu0 0.0
          %2347 = vmatprep.subr.mxu0 0.0
          %2348 = vmatpush1.msra.mxu0 0.0
          %2349 = vmatprep.subr.mxu0 0.0
          %2350 = vmatpush1.msra.mxu0 0.0
          %2351 = vmatprep.subr.mxu0 0.0
          %2352 = vmatpush1.msra.mxu0 0.0
          %2353 = vmatprep.subr.mxu0 0.0
          %2354 = vmatpush1.msra.mxu0 0.0
          %2355 = vmatprep.subr.mxu0 0.0
          %2356 = vmatpush1.msra.mxu0 0.0
          %2357 = vmatprep.subr.mxu0 0.0
          %2358 = vmatpush1.msra.mxu0 0.0
          %2359 = vmatprep.subr.mxu0 0.0
          %2360 = vmatpush1.msra.mxu0 0.0
          %2361 = vmatprep.subr.mxu0 0.0
          %2362 = vmatpush1.msra.mxu0 0.0
          %2363 = vmatprep.subr.mxu0 0.0
          %2364 = vmatpush1.msra.mxu0 0.0
          %2365 = vmatprep.subr.mxu0 0.0
          %2366 = vmatpush1.msra.mxu0 0.0
          %2367 = vmatprep.subr.mxu0 0.0
          %2368 = vmatpush1.msra.mxu0 0.0
          %2369 = vmatprep.subr.mxu0 0.0
          %2370 = vmatpush1.msra.mxu0 0.0
          %2371 = vmatprep.subr.mxu0 0.0
          %2372 = vmatpush1.msra.mxu0 0.0
          %2373 = vmatprep.subr.mxu0 0.0
          %2374 = vmatpush1.msra.mxu0 0.0
          %2375 = vmatprep.subr.mxu0 0.0
          %2376 = vmatpush1.msra.mxu0 0.0
          %2377 = vmatprep.subr.mxu0 0.0
          %2378 = vmatpush1.msra.mxu0 0.0
          %2379 = vmatprep.subr.mxu0 0.0
          %2380 = vmatpush1.msra.mxu0 0.0
          %2381 = vmatprep.subr.mxu0 0.0
          %2382 = vmatpush1.msra.mxu0 0.0
          %2383 = vmatprep.subr.mxu0 0.0
          %2384 = vmatpush1.msra.mxu0 0.0
          %2385 = vmatprep.subr.mxu0 0.0
          %2386 = vmatpush1.msra.mxu0 0.0
          %2387 = vmatprep.subr.mxu0 0.0
          %2388 = vmatpush1.msra.mxu0 0.0
          %2389 = vmatprep.mubr.f32.mxu0 0.0
          %2390 = vmatmul.mubr.f32.gmra.mrb[0].mxu0 %v2323
          %v2391 = vpop.f32.mrb[0].mxu0
          %v2392 = vadd.f32 0.0, %v2391
          %v2393 = vpop.f32.mrb[0].mxu0
          %2394 = vdwg.mxu0
          %v2396 = vsel %vm1549, %v2315, 0
          %2398 = vmatprep.subr.mxu0 0.0
          %2399 = vmatpush1.msra.mxu0 %v2319
          %2400 = vmatprep.subr.mxu0 0.0
          %2401 = vmatpush1.msra.mxu0 0.0
          %2402 = vmatprep.subr.mxu0 0.0
          %2403 = vmatpush1.msra.mxu0 0.0
          %2404 = vmatprep.subr.mxu0 0.0
          %2405 = vmatpush1.msra.mxu0 0.0
          %2406 = vmatprep.subr.mxu0 0.0
          %2407 = vmatpush1.msra.mxu0 0.0
          %2408 = vmatprep.subr.mxu0 0.0
          %2409 = vmatpush1.msra.mxu0 0.0
          %2410 = vmatprep.subr.mxu0 0.0
          %2411 = vmatpush1.msra.mxu0 0.0
          %2412 = vmatprep.subr.mxu0 0.0
          %2413 = vmatpush1.msra.mxu0 0.0
          %2414 = vmatprep.subr.mxu0 0.0
          %2415 = vmatpush1.msra.mxu0 0.0
          %2416 = vmatprep.subr.mxu0 0.0
          %2417 = vmatpush1.msra.mxu0 0.0
          %2418 = vmatprep.subr.mxu0 0.0
          %2419 = vmatpush1.msra.mxu0 0.0
          %2420 = vmatprep.subr.mxu0 0.0
          %2421 = vmatpush1.msra.mxu0 0.0
          %2422 = vmatprep.subr.mxu0 0.0
          %2423 = vmatpush1.msra.mxu0 0.0
          %2424 = vmatprep.subr.mxu0 0.0
          %2425 = vmatpush1.msra.mxu0 0.0
          %2426 = vmatprep.subr.mxu0 0.0
          %2427 = vmatpush1.msra.mxu0 0.0
          %2428 = vmatprep.subr.mxu0 0.0
          %2429 = vmatpush1.msra.mxu0 0.0
          %2430 = vmatprep.subr.mxu0 0.0
          %2431 = vmatpush1.msra.mxu0 0.0
          %2432 = vmatprep.subr.mxu0 0.0
          %2433 = vmatpush1.msra.mxu0 0.0
          %2434 = vmatprep.subr.mxu0 0.0
          %2435 = vmatpush1.msra.mxu0 0.0
          %2436 = vmatprep.subr.mxu0 0.0
          %2437 = vmatpush1.msra.mxu0 0.0
          %2438 = vmatprep.subr.mxu0 0.0
          %2439 = vmatpush1.msra.mxu0 0.0
          %2440 = vmatprep.subr.mxu0 0.0
          %2441 = vmatpush1.msra.mxu0 0.0
          %2442 = vmatprep.subr.mxu0 0.0
          %2443 = vmatpush1.msra.mxu0 0.0
          %2444 = vmatprep.subr.mxu0 0.0
          %2445 = vmatpush1.msra.mxu0 0.0
          %2446 = vmatprep.subr.mxu0 0.0
          %2447 = vmatpush1.msra.mxu0 0.0
          %2448 = vmatprep.subr.mxu0 0.0
          %2449 = vmatpush1.msra.mxu0 0.0
          %2450 = vmatprep.subr.mxu0 0.0
          %2451 = vmatpush1.msra.mxu0 0.0
          %2452 = vmatprep.subr.mxu0 0.0
          %2453 = vmatpush1.msra.mxu0 0.0
          %2454 = vmatprep.subr.mxu0 0.0
          %2455 = vmatpush1.msra.mxu0 0.0
          %2456 = vmatprep.subr.mxu0 0.0
          %2457 = vmatpush1.msra.mxu0 0.0
          %2458 = vmatprep.subr.mxu0 0.0
          %2459 = vmatpush1.msra.mxu0 0.0
          %2460 = vmatprep.subr.mxu0 0.0
          %2461 = vmatpush1.msra.mxu0 0.0
          %2462 = vmatprep.mubr.f32.mxu0 0.0
          %2463 = vmatmul.mubr.f32.gmra.mrb[0].mxu0 %v2396
          %v2464 = vpop.f32.mrb[0].mxu0
          %v2465 = vadd.f32 0.0, %v2464
          %v2466 = vpop.f32.mrb[0].mxu0
          %2467 = vdwg.mxu0
          %v2469 = vsel %vm1549, %v2316, 0
          %2471 = vmatprep.subr.mxu0 0.0
          %2472 = vmatpush1.msra.mxu0 %v2320
          %2473 = vmatprep.subr.mxu0 0.0
          %2474 = vmatpush1.msra.mxu0 0.0
          %2475 = vmatprep.subr.mxu0 0.0
          %2476 = vmatpush1.msra.mxu0 0.0
          %2477 = vmatprep.subr.mxu0 0.0
          %2478 = vmatpush1.msra.mxu0 0.0
          %2479 = vmatprep.subr.mxu0 0.0
          %2480 = vmatpush1.msra.mxu0 0.0
          %2481 = vmatprep.subr.mxu0 0.0
          %2482 = vmatpush1.msra.mxu0 0.0
          %2483 = vmatprep.subr.mxu0 0.0
          %2484 = vmatpush1.msra.mxu0 0.0
          %2485 = vmatprep.subr.mxu0 0.0
          %2486 = vmatpush1.msra.mxu0 0.0
          %2487 = vmatprep.subr.mxu0 0.0
          %2488 = vmatpush1.msra.mxu0 0.0
          %2489 = vmatprep.subr.mxu0 0.0
          %2490 = vmatpush1.msra.mxu0 0.0
          %2491 = vmatprep.subr.mxu0 0.0
          %2492 = vmatpush1.msra.mxu0 0.0
          %2493 = vmatprep.subr.mxu0 0.0
          %2494 = vmatpush1.msra.mxu0 0.0
          %2495 = vmatprep.subr.mxu0 0.0
          %2496 = vmatpush1.msra.mxu0 0.0
          %2497 = vmatprep.subr.mxu0 0.0
          %2498 = vmatpush1.msra.mxu0 0.0
          %2499 = vmatprep.subr.mxu0 0.0
          %2500 = vmatpush1.msra.mxu0 0.0
          %2501 = vmatprep.subr.mxu0 0.0
          %2502 = vmatpush1.msra.mxu0 0.0
          %2503 = vmatprep.subr.mxu0 0.0
          %2504 = vmatpush1.msra.mxu0 0.0
          %2505 = vmatprep.subr.mxu0 0.0
          %2506 = vmatpush1.msra.mxu0 0.0
          %2507 = vmatprep.subr.mxu0 0.0
          %2508 = vmatpush1.msra.mxu0 0.0
          %2509 = vmatprep.subr.mxu0 0.0
          %2510 = vmatpush1.msra.mxu0 0.0
          %2511 = vmatprep.subr.mxu0 0.0
          %2512 = vmatpush1.msra.mxu0 0.0
          %2513 = vmatprep.subr.mxu0 0.0
          %2514 = vmatpush1.msra.mxu0 0.0
          %2515 = vmatprep.subr.mxu0 0.0
          %2516 = vmatpush1.msra.mxu0 0.0
          %2517 = vmatprep.subr.mxu0 0.0
          %2518 = vmatpush1.msra.mxu0 0.0
          %2519 = vmatprep.subr.mxu0 0.0
          %2520 = vmatpush1.msra.mxu0 0.0
          %2521 = vmatprep.subr.mxu0 0.0
          %2522 = vmatpush1.msra.mxu0 0.0
          %2523 = vmatprep.subr.mxu0 0.0
          %2524 = vmatpush1.msra.mxu0 0.0
          %2525 = vmatprep.subr.mxu0 0.0
          %2526 = vmatpush1.msra.mxu0 0.0
          %2527 = vmatprep.subr.mxu0 0.0
          %2528 = vmatpush1.msra.mxu0 0.0
          %2529 = vmatprep.subr.mxu0 0.0
          %2530 = vmatpush1.msra.mxu0 0.0
          %2531 = vmatprep.subr.mxu0 0.0
          %2532 = vmatpush1.msra.mxu0 0.0
          %2533 = vmatprep.subr.mxu0 0.0
          %2534 = vmatpush1.msra.mxu0 0.0
          %2535 = vmatprep.mubr.f32.mxu0 0.0
          %2536 = vmatmul.mubr.f32.gmra.mrb[0].mxu0 %v2469
          %v2537 = vpop.f32.mrb[0].mxu0
          %v2538 = vadd.f32 0.0, %v2537
          %v2539 = vpop.f32.mrb[0].mxu0
          %2540 = vdwg.mxu0
          %v2542 = vsel %vm1549, %v2317, 0
          %2544 = vmatprep.subr.mxu0 0.0
          %2545 = vmatpush1.msra.mxu0 %v2321
          %2546 = vmatprep.subr.mxu0 0.0
          %2547 = vmatpush1.msra.mxu0 0.0
          %2548 = vmatprep.subr.mxu0 0.0
          %2549 = vmatpush1.msra.mxu0 0.0
          %2550 = vmatprep.subr.mxu0 0.0
          %2551 = vmatpush1.msra.mxu0 0.0
          %2552 = vmatprep.subr.mxu0 0.0
          %2553 = vmatpush1.msra.mxu0 0.0
          %2554 = vmatprep.subr.mxu0 0.0
          %2555 = vmatpush1.msra.mxu0 0.0
          %2556 = vmatprep.subr.mxu0 0.0
          %2557 = vmatpush1.msra.mxu0 0.0
          %2558 = vmatprep.subr.mxu0 0.0
          %2559 = vmatpush1.msra.mxu0 0.0
          %2560 = vmatprep.subr.mxu0 0.0
          %2561 = vmatpush1.msra.mxu0 0.0
          %2562 = vmatprep.subr.mxu0 0.0
          %2563 = vmatpush1.msra.mxu0 0.0
          %2564 = vmatprep.subr.mxu0 0.0
          %2565 = vmatpush1.msra.mxu0 0.0
          %2566 = vmatprep.subr.mxu0 0.0
          %2567 = vmatpush1.msra.mxu0 0.0
          %2568 = vmatprep.subr.mxu0 0.0
          %2569 = vmatpush1.msra.mxu0 0.0
          %2570 = vmatprep.subr.mxu0 0.0
          %2571 = vmatpush1.msra.mxu0 0.0
          %2572 = vmatprep.subr.mxu0 0.0
          %2573 = vmatpush1.msra.mxu0 0.0
          %2574 = vmatprep.subr.mxu0 0.0
          %2575 = vmatpush1.msra.mxu0 0.0
          %2576 = vmatprep.subr.mxu0 0.0
          %2577 = vmatpush1.msra.mxu0 0.0
          %2578 = vmatprep.subr.mxu0 0.0
          %2579 = vmatpush1.msra.mxu0 0.0
          %2580 = vmatprep.subr.mxu0 0.0
          %2581 = vmatpush1.msra.mxu0 0.0
          %2582 = vmatprep.subr.mxu0 0.0
          %2583 = vmatpush1.msra.mxu0 0.0
          %2584 = vmatprep.subr.mxu0 0.0
          %2585 = vmatpush1.msra.mxu0 0.0
          %2586 = vmatprep.subr.mxu0 0.0
          %2587 = vmatpush1.msra.mxu0 0.0
          %2588 = vmatprep.subr.mxu0 0.0
          %2589 = vmatpush1.msra.mxu0 0.0
          %2590 = vmatprep.subr.mxu0 0.0
          %2591 = vmatpush1.msra.mxu0 0.0
          %2592 = vmatprep.subr.mxu0 0.0
          %2593 = vmatpush1.msra.mxu0 0.0
          %2594 = vmatprep.subr.mxu0 0.0
          %2595 = vmatpush1.msra.mxu0 0.0
          %2596 = vmatprep.subr.mxu0 0.0
          %2597 = vmatpush1.msra.mxu0 0.0
          %2598 = vmatprep.subr.mxu0 0.0
          %2599 = vmatpush1.msra.mxu0 0.0
          %2600 = vmatprep.subr.mxu0 0.0
          %2601 = vmatpush1.msra.mxu0 0.0
          %2602 = vmatprep.subr.mxu0 0.0
          %2603 = vmatpush1.msra.mxu0 0.0
          %2604 = vmatprep.subr.mxu0 0.0
          %2605 = vmatpush1.msra.mxu0 0.0
          %2606 = vmatprep.subr.mxu0 0.0
          %2607 = vmatpush1.msra.mxu0 0.0
          %2608 = vmatprep.mubr.f32.mxu0 0.0
          %2609 = vmatmul.mubr.f32.gmra.mrb[0].mxu0 %v2542
          %v2610 = vpop.f32.mrb[0].mxu0
          %v2611 = vadd.f32 0.0, %v2610
          %v2612 = vpop.f32.mrb[0].mxu0
          %2613 = vdwg.mxu0
          %vm2614 = vcmask 261120
          %v2615 = vsel %vm2614, %v2392, 0.0
          %v2616 = vsel %vm2614, %v2465, 0.0
          %v2617 = vadd.f32 %v2615, %v2616
          %v2618 = vsel %vm2614, %v2538, 0.0
          %v2619 = vadd.f32 %v2617, %v2618
          %v2620 = vsel %vm2614, %v2611, 0.0
          %v2621 = vadd.f32 %v2619, %v2620
          %v2622 = vld [vmem:[#allocation21] sm:$0x1]
          %v2624 = vlaneseq
          %v2625 = vshrl.u32 %v2624, 7
          %v2626 = vsub.s32 0, %v2625
          %v2627 = vrot.slane %v2622, %v2626
          %v2629 = vadd.f32 %v2621, %v2627
          %2630 = vst.msk [vmem:[%s552] sm:$0xff] %vm2614, %v2629
        $region108: #{tpu_custom_call.1} parent=59 // pred_fallthru
          _
        %s2631 = sand.u32 %s287, 1
        %s2632 = scalar_lea.sflag [#allocation8], %s2631
        %s2633 = sand.u32 %s287, 1
        %s2634 = smul.addr %s2633, 8
        %s2635 = scalar_lea.vmem [#allocation23], %s2634
        // Predicated region
        $region109: #{tpu_custom_call.1} parent=59 // pred_check
          %p2636 = pneg %p297
        $region110: #{tpu_custom_call.1} parent=59 // pred_check_branch
          %2638 = sbr.rel (%p2636) target = $region112
        $region111: #{tpu_custom_call.1} parent=59 // pred_region
          %s2640 = ssub.s32 128, 128
          %2641 = vsyncadd %s2632, %s2640
          %s2642 = sadd.s32 %s40, %s39
          %s2643 = smul.addr %s2642, 128
          %s2644 = scalar_lea.hbm %s10, %s2643
          %s2646 = sshll.u32 %s2635, 4
          %s2647 = int_to_ptr.vmem [resolvable:$true] %s2646
          %2649 = dma.vmem_to_hbm [thread:$0]  %s2647, 128, %s2644, %s2632
        $region112: #{tpu_custom_call.1} parent=59 // pred_fallthru
          _
      $region60: #{tpu_custom_call.1} parent=5 // pred_fallthru
        _
      %p2650 = scmp.le.s32.totalorder 2, %s29
      // Predicated region
      $region113: #{tpu_custom_call.1} parent=5 // pred_check
        %p2651 = pneg %p2650
      $region114: #{tpu_custom_call.1} parent=5 // pred_check_branch
        %2653 = sbr.rel (%p2651) target = $region116
      $region115: #{tpu_custom_call.1} parent=5 // pred_region
        %s2654 = ssub.s32 %s29, 2
        // Predicated region
        $region117: #{tpu_custom_call.1} parent=115 // pred_check
          %p2655 = pneg %p303
        $region118: #{tpu_custom_call.1} parent=115 // pred_check_branch
          %2657 = sbr.rel (%p2655) target = $region120
        $region119: #{tpu_custom_call.1} parent=115 // pred_region
          %s2658 = sand.u32 %s288, 1
          %s2659 = scalar_lea.sflag [#allocation8], %s2658
          %s2660 = sand.u32 %s288, 1
          %s2661 = smul.addr %s2660, 8
          %s2662 = scalar_lea.vmem [#allocation23], %s2661
          %2663 = dma.done %s2659, 128
        $region120: #{tpu_custom_call.1} parent=115 // pred_fallthru
          _
      $region116: #{tpu_custom_call.1} parent=5 // pred_fallthru
        _
    $region6: #{tpu_custom_call.1} parent=1 // loop_footer
      %s33 = sadd.s32 1, %s29
    $region7: #{tpu_custom_call.1} parent=1 // loop_footer_branch
      %28 = sbr.rel target = $region3
    $region8: #{tpu_custom_call.1} parent=1 // loop_exit
      _
    %2664 = vsyncpa [#allocation7], 1
    %s2665 = scalar_lea.sflag [#allocation7], 1
    %2666 = vsyncpa %s2665, 1
    %2667 = vsyncpa [#allocation10], 1
    %s2668 = scalar_lea.sflag [#allocation10], 1
    %2669 = vsyncpa %s2668, 1
    %2670 = vsyncpa [#allocation13], 1
    %2671 = vsyncpa [#allocation16], 1
    %2672 = vsyncpa [#allocation19], 1
    %2673 = vsyncpa [#allocation22], 1
    %2674 = vsyncpa [#allocation8], 1
    %s2675 = scalar_lea.sflag [#allocation8], 1
    %2676 = vsyncpa %s2675, 1

</llo_original>
